<compile_context>
chip_gen: v5e
topology: v5e:2x2
jax: 0.10.0
libtpu: 0.0.40
codegen_flags: <defaults>
</compile_context>

<pallas_src>
import functools

import jax
import jax.numpy as jnp
from jax import lax
from jax.experimental import pallas as pl
from jax.experimental.pallas import tpu as pltpu


def _round_up(a: int, b: int) -> int:
    return ((a + b - 1) // b) * b


def _tpu_generation() -> int:
    """Best-effort TPU generation from device_kind; defaults to 6."""
    try:
        kind = jax.devices()[0].device_kind.lower()
    except Exception:  # pragma: no cover - defensive
        return 6
    for gen in (7, 6, 5, 4):
        if f"v{gen}" in kind or f"tpu{gen}" in kind:
            return gen
    return 6


def _make_activation(activation_type: str, power: float):
    acts = {
        "relu": lambda x: jnp.maximum(x, 0.0),
        "gelu": lambda x: jax.nn.gelu(x, approximate=False),
        "silu": jax.nn.silu,
        "tanh": jnp.tanh,
        "leaky": lambda x: jnp.where(x >= 0, x, 0.2 * x),
        "sin": jnp.sin,
        "sin_residual": lambda x: jnp.sin(x) + 0.5 * x,
        "relu_sin": lambda x: jnp.sin(jnp.maximum(x, 0.0)) + jnp.maximum(0.5 * x, 0.0),
        "sign_gelu2": lambda x: jnp.where(x < 0, -20.0, jnp.sign(x))
        * jnp.square(jax.nn.gelu(x, approximate=False)),
        "relu_fwd_silu_bwd": lambda x: jnp.maximum(x, 0.0),  # forward pass is relu
        "identity": lambda x: x,
    }
    if activation_type not in acts:
        # TODO(synk): 'norm_exp' (stateful running-average buffer) and 'sinlu'
        # (learned per-dim a/b parameters) need extra state threaded into the
        # kernel; not implemented here.
        raise NotImplementedError(f"activation_type={activation_type!r}")
    base = acts[activation_type]
    if power != 1.0:
        return lambda x: jnp.power(base(x), power)
    return base


def _maybe_buffered_spec(block_shape, index_map, n_buffers):
    if n_buffers > 2:
        try:
            return pl.BlockSpec(block_shape, index_map,
                                pipeline_mode=pl.Buffered(n_buffers))
        except TypeError:  # older API without pipeline_mode - fall back safely
            pass
    return pl.BlockSpec(block_shape, index_map)


def _kernel_accum_out(x_ref, w_ref, b_ref, o_ref, *, act, pre, precision):
    """f32-output path: accumulate directly into o_ref (no scratch)."""
    k = pl.program_id(2)

    @pl.when(k == 0)
    def _init():
        o_ref[...] = jnp.zeros_like(o_ref)

    x = x_ref[...]
    if pre:
        # pre-activation on the x tile (recomputed per N tile; elementwise, cheap)
        x = act(x.astype(jnp.float32)).astype(x_ref.dtype)

    o_ref[...] += jnp.dot(x, w_ref[...],
                          preferred_element_type=jnp.float32,
                          precision=precision)

    @pl.when(k == pl.num_programs(2) - 1)
    def _epilogue():
        y = o_ref[...] + b_ref[...].astype(jnp.float32)
        if not pre:
            y = act(y)
        o_ref[...] = y


def _kernel_scratch(x_ref, w_ref, b_ref, o_ref, acc_ref, *, act, pre, precision):
    """Narrow-output path: f32 accumulator scratch, cast in the epilogue."""
    k = pl.program_id(2)

    @pl.when(k == 0)
    def _init():
        acc_ref[...] = jnp.zeros_like(acc_ref)

    x = x_ref[...]
    if pre:
        x = act(x.astype(jnp.float32)).astype(x_ref.dtype)

    acc_ref[...] += jnp.dot(x, w_ref[...],
                            preferred_element_type=jnp.float32,
                            precision=precision)

    @pl.when(k == pl.num_programs(2) - 1)
    def _epilogue():
        y = acc_ref[...] + b_ref[...].astype(jnp.float32)
        if not pre:
            y = act(y)
        o_ref[...] = y.astype(o_ref.dtype)


def linear_act(x, weight, bias=None, *,
               activation_type="relu", power=1.0, pre_act=False,
               w_is_transposed=False,
               tm=1024, tn=1024, tk=512,
               compute_dtype=None,
               precision=None):
    """y = post_act(pre_act(x) @ W^T + b) as a Pallas TPU kernel.

    x:      (B, in_features)
    weight: (out_features, in_features) nn.Linear layout, or (in_features,
            out_features) if w_is_transposed=True (preferred for hot loops:
            pre-transpose once at init so the kernel contracts canonically
            with zero per-call weight work).
    bias:   (out_features,) or None.
    compute_dtype: e.g. jnp.bfloat16 to feed the MXU natively (f32 accumulate,
            output stays in x's original dtype).
    """
    B, K = x.shape
    if w_is_transposed:
        Kw, N = weight.shape
    else:
        N, Kw = weight.shape
    assert Kw == K, (Kw, K)

    out_dtype = x.dtype
    if compute_dtype is not None:
        x = x.astype(compute_dtype)
        weight = weight.astype(compute_dtype)
    in_dtype = x.dtype
    in_bytes = jnp.dtype(in_dtype).itemsize
    out_bytes = jnp.dtype(out_dtype).itemsize

    if bias is None:
        bias = jnp.zeros((N,), out_dtype)

    gen = _tpu_generation()
    nk_align = 128 if gen <= 5 else 256          # MXU is 2x256^2 on v6e/v7x
    m_align = {4: 8, 2: 16, 1: 32}.get(in_bytes, 8)

    # Clamp tiles to the (aligned) problem size, keep them layout-aligned.
    tm = _round_up(min(tm, _round_up(B, m_align)), m_align)
    tn = _round_up(min(tn, _round_up(N, nk_align)), 128)
    tk = _round_up(min(tk, _round_up(K, nk_align)), 128)

    n_buf = 3 if gen <= 5 else 2                 # triple-buffer x/w on v5e
    vmem_cap = (52 << 20) if gen >= 7 else (100 << 20)   # headroom under 64/128 MiB
    budget = vmem_cap - (8 << 20)
    use_scratch = jnp.dtype(out_dtype) != jnp.dtype(jnp.float32)

    def working_set(tm_, tn_, tk_):
        return (n_buf * (tm_ * tk_ + tk_ * tn_) * in_bytes
                + 2 * tm_ * tn_ * out_bytes
                + 2 * tn_ * jnp.dtype(bias.dtype).itemsize
                + (tm_ * tn_ * 4 if use_scratch else 0))

    # Shrink tiles if the double-buffered working set would overflow VMEM.
    while working_set(tm, tn, tk) > budget:
        if tn >= 2 * nk_align:
            tn = _round_up(tn // 2, 128)
        elif tm >= 2 * m_align:
            tm = _round_up(tm // 2, m_align)
        elif tk >= 2 * nk_align:
            tk = _round_up(tk // 2, 128)
        else:
            break

    M_pad = _round_up(B, tm)
    K_pad = _round_up(K, tk)
    N_pad = _round_up(N, tn)

    # v7x has 2 TensorCores per chip: guarantee >=2 tiles on a parallel axis.
    if gen >= 7 and M_pad // tm == 1 and N_pad // tn == 1:
        if tn % 2 == 0 and (tn // 2) % nk_align == 0:
            tn //= 2                              # N_pad % tn stays 0

    # Pad only when the shapes are not already tile-aligned.
    if (B, K) != (M_pad, K_pad):
        x = jnp.pad(x, ((0, M_pad - B), (0, K_pad - K)))
    w_t = weight if w_is_transposed else weight.T          # (K, N) for canonical dot
    if (K, N) != (K_pad, N_pad):
        w_t = jnp.pad(w_t, ((0, K_pad - K), (0, N_pad - N)))
    b2 = bias.reshape(1, N)
    if N != N_pad:
        b2 = jnp.pad(b2, ((0, 0), (0, N_pad - N)))

    grid = (M_pad // tm, N_pad // tn, K_pad // tk)
    grid_m, grid_n, grid_k = grid

    act = _make_activation(activation_type, power)
    if use_scratch:
        kernel = functools.partial(_kernel_scratch, act=act, pre=pre_act,
                                   precision=precision)
        scratch_shapes = [pltpu.VMEM((tm, tn), jnp.float32)]
    else:
        kernel = functools.partial(_kernel_accum_out, act=act, pre=pre_act,
                                   precision=precision)
        scratch_shapes = []

    transcendental_acts = ("gelu", "silu", "tanh", "sin", "sin_residual",
                           "relu_sin", "sign_gelu2")
    cost = pl.CostEstimate(
        flops=2 * M_pad * N_pad * K_pad,
        transcendentals=(M_pad * N_pad if activation_type in transcendental_acts else 0),
        # Tiled re-reads: each x tile is re-read per N tile, each w tile per M tile.
        bytes_accessed=((M_pad * K_pad * grid_n + K_pad * N_pad * grid_m) * in_bytes
                        + M_pad * N_pad * out_bytes + N_pad * in_bytes),
    )

    in_specs = [
        _maybe_buffered_spec((tm, tk), lambda i, j, k: (i, k), n_buf),   # x
        _maybe_buffered_spec((tk, tn), lambda i, j, k: (k, j), n_buf),   # W^T (K, N)
        pl.BlockSpec((1, tn), lambda i, j, k: (0, j)),                   # bias
    ]

    out = pl.pallas_call(
        kernel,
        out_shape=jax.ShapeDtypeStruct((M_pad, N_pad), out_dtype),
        grid_spec=pltpu.PrefetchScalarGridSpec(
            num_scalar_prefetch=0,
            grid=grid,
            in_specs=in_specs,
            out_specs=pl.BlockSpec((tm, tn), lambda i, j, k: (i, j)),
            scratch_shapes=scratch_shapes,
        ),
        compiler_params=pltpu.CompilerParams(
            dimension_semantics=("parallel", "parallel", "arbitrary"),
            vmem_limit_bytes=int(vmem_cap),
        ),
        cost_estimate=cost,
    )(x, w_t, b2)

    if (M_pad, N_pad) != (B, N):
        out = out[:B, :N]
    return out


def _init_linear_params(key, in_features, out_features):
    # Deterministic init mimicking nn.Linear's default (uniform +/- 1/sqrt(fan_in)).
    kw, kb = jax.random.split(key)
    bound = 1.0 / float(in_features) ** 0.5
    weight = jax.random.uniform(kw, (out_features, in_features),
                                jnp.float32, -bound, bound)
    bias = jax.random.uniform(kb, (out_features,), jnp.float32, -bound, bound)
    return weight, bias


if __name__ == "__main__":
    key = jax.random.PRNGKey(0)
    k_x, k_p = jax.random.split(key)

    batch, in_features, out_features = 8, 32, 64
    x = jax.random.normal(k_x, (batch, in_features), jnp.float32)
    weight, bias = _init_linear_params(k_p, in_features, out_features)

    # Use HIGHEST precision on both kernel and reference so the f32 check is tight.
    run = jax.jit(lambda a, w, b: linear_act(a, w, b,
                                             precision=lax.Precision.HIGHEST))
    y = jax.block_until_ready(run(x, weight, bias))
    y_ref = jnp.maximum(
        jnp.dot(x, weight.T, precision=lax.Precision.HIGHEST) + bias, 0.0)
    assert y.shape == (batch, out_features)
    assert jnp.allclose(y, y_ref, atol=1e-5, rtol=1e-5), float(
        jnp.max(jnp.abs(y - y_ref)))

    # Second check: ragged shapes exercising multi-tile M/N/K grid + padding.
    k_x2, k_p2 = jax.random.split(jax.random.PRNGKey(1))
    B2, K2, N2 = 150, 520, 300
    x2 = jax.random.normal(k_x2, (B2, K2), jnp.float32)
    w2, b2 = _init_linear_params(k_p2, K2, N2)
    run2 = jax.jit(lambda a, w, b: linear_act(a, w, b, tm=64, tn=256, tk=256,
                                              precision=lax.Precision.HIGHEST))
    y2 = jax.block_until_ready(run2(x2, w2, b2))
    y2_ref = jnp.maximum(
        jnp.dot(x2, w2.T, precision=lax.Precision.HIGHEST) + b2, 0.0)
    assert y2.shape == (B2, N2)
    assert jnp.allclose(y2, y2_ref, atol=1e-4, rtol=1e-4), float(
        jnp.max(jnp.abs(y2 - y2_ref)))

    print("KERNEL_OK")
</pallas_src>

<mosaic_0001>
module attributes {stable_mosaic.version = 11 : i64} {
  func.func @_kernel_accum_out(%arg0: i32, %arg1: i32, %arg2: i32, %arg3: memref<8x256xf32, #tpu.memory_space<vmem>>, %arg4: memref<256x256xf32, #tpu.memory_space<vmem>>, %arg5: memref<1x256xf32, #tpu.memory_space<vmem>>, %arg6: memref<8x256xf32, #tpu.memory_space<vmem>>) attributes {dimension_semantics = [#tpu.dimension_semantics<parallel>, #tpu.dimension_semantics<parallel>, #tpu.dimension_semantics<arbitrary>], iteration_bounds = array<i64: 1, 1, 1>, scalar_prefetch = 0 : i64, scratch_operands = 0 : i64, tpu.core_type = #tpu.core_type<tc>, window_params = [{transform_indices = @transform_0, window_bounds = array<i64: 8, 256>}, {transform_indices = @transform_1, window_bounds = array<i64: 256, 256>}, {transform_indices = @transform_2, window_bounds = array<i64: 1, 256>}, {transform_indices = @transform_3, window_bounds = array<i64: 8, 256>}]} {
    %c0_i32 = arith.constant 0 : i32
    %0 = arith.cmpi eq, %arg2, %c0_i32 : i32
    %1 = arith.extui %0 : i1 to i32
    %c0_i32_0 = arith.constant 0 : i32
    %2 = arith.cmpi ne, %1, %c0_i32_0 : i32
    scf.if %2 {
      %cst_10 = arith.constant 0.000000e+00 : f32
      %12 = vector.broadcast %cst_10 : f32 to vector<8x256xf32>
      %c0_11 = arith.constant 0 : index
      %c0_12 = arith.constant 0 : index
      %13 = vector.load %arg6[%c0_11, %c0_12] : memref<8x256xf32, #tpu.memory_space<vmem>>, vector<8x256xf32>
      tpu.vector_store %arg6[%c0_11, %c0_12], %12 {strides = array<i32>} : memref<8x256xf32, #tpu.memory_space<vmem>>, vector<8x256xf32>,
    } else {
    }
    %c0 = arith.constant 0 : index
    %c0_1 = arith.constant 0 : index
    %3 = vector.load %arg3[%c0, %c0_1] : memref<8x256xf32, #tpu.memory_space<vmem>>, vector<8x256xf32>
    %c0_2 = arith.constant 0 : index
    %c0_3 = arith.constant 0 : index
    %4 = vector.load %arg6[%c0_2, %c0_3] : memref<8x256xf32, #tpu.memory_space<vmem>>, vector<8x256xf32>
    %c0_4 = arith.constant 0 : index
    %c0_5 = arith.constant 0 : index
    %5 = vector.load %arg4[%c0_4, %c0_5] : memref<256x256xf32, #tpu.memory_space<vmem>>, vector<256x256xf32>
    %cst = arith.constant dense<0.000000e+00> : vector<8x256xf32>
    %6 = tpu.matmul %3, %5, %cst {dimension_numbers = #tpu.dot_dimension_numbers<[1], [0], [0], [1], [0, 0, 1, 1], [], []>, precision = #tpu.contract_precision<fp32>} : vector<8x256xf32>, vector<256x256xf32>, vector<8x256xf32> -> vector<8x256xf32>
    %7 = arith.addf %4, %6 : vector<8x256xf32>
    %c0_6 = arith.constant 0 : index
    %c0_7 = arith.constant 0 : index
    %8 = vector.load %arg6[%c0_6, %c0_7] : memref<8x256xf32, #tpu.memory_space<vmem>>, vector<8x256xf32>
    tpu.vector_store %arg6[%c0_6, %c0_7], %7 {strides = array<i32>} : memref<8x256xf32, #tpu.memory_space<vmem>>, vector<8x256xf32>,
    %c0_i32_8 = arith.constant 0 : i32
    %9 = arith.cmpi eq, %arg2, %c0_i32_8 : i32
    %10 = arith.extui %9 : i1 to i32
    %c0_i32_9 = arith.constant 0 : i32
    %11 = arith.cmpi ne, %10, %c0_i32_9 : i32
    scf.if %11 {
      %c0_10 = arith.constant 0 : index
      %c0_11 = arith.constant 0 : index
      %12 = vector.load %arg6[%c0_10, %c0_11] : memref<8x256xf32, #tpu.memory_space<vmem>>, vector<8x256xf32>
      %c0_12 = arith.constant 0 : index
      %c0_13 = arith.constant 0 : index
      %13 = vector.load %arg5[%c0_12, %c0_13] : memref<1x256xf32, #tpu.memory_space<vmem>>, vector<1x256xf32>
      %14 = vector.broadcast %13 : vector<1x256xf32> to vector<8x256xf32>
      %15 = arith.addf %12, %14 : vector<8x256xf32>
      %cst_14 = arith.constant 0.000000e+00 : f32
      %16 = vector.broadcast %cst_14 : f32 to vector<8x256xf32>
      %17 = arith.maximumf %15, %16 : vector<8x256xf32>
      %c0_15 = arith.constant 0 : index
      %c0_16 = arith.constant 0 : index
      %18 = vector.load %arg6[%c0_15, %c0_16] : memref<8x256xf32, #tpu.memory_space<vmem>>, vector<8x256xf32>
      tpu.vector_store %arg6[%c0_15, %c0_16], %17 {strides = array<i32>} : memref<8x256xf32, #tpu.memory_space<vmem>>, vector<8x256xf32>,
    } else {
    }
    return
  }
  func.func @transform_0(%arg0: i32, %arg1: i32, %arg2: i32) -> (i32, i32) {
    %c0_i32 = arith.constant 0 : i32
    return %arg0, %arg2 : i32, i32
  }
  func.func @transform_1(%arg0: i32, %arg1: i32, %arg2: i32) -> (i32, i32) {
    %c0_i32 = arith.constant 0 : i32
    return %arg2, %arg1 : i32, i32
  }
  func.func @transform_2(%arg0: i32, %arg1: i32, %arg2: i32) -> (i32, i32) {
    %c0_i32 = arith.constant 0 : i32
    %c0_i32_0 = arith.constant 0 : i32
    return %c0_i32, %arg1 : i32, i32
  }
  func.func @transform_3(%arg0: i32, %arg1: i32, %arg2: i32) -> (i32, i32) {
    %c0_i32 = arith.constant 0 : i32
    return %arg0, %arg1 : i32, i32
  }
}

</mosaic_0001>

<llo_original>
// kernel: _lambda_.1
$region0: #{_lambda_.1}
  #allocation0 [shape = 'u32[]', space=smem, size = 0x4, offset = 0x4, fixed_abs, tag = 'smem constant byte address 0x4 - core index']
  #allocation1 [shape = 'u32[72,128]{1,0:T(1,128)}', space=vmem, size = 0x9000, scoped, tag = 'internal scratch']
  %s0 = inlined_call_operand.vmem [shape: f32[8,256], index: 0, kind: input, shape index: {}]
  %s1 = inlined_call_operand.vmem [shape: f32[256,256], index: 1, kind: input, shape index: {}]
  %s2 = inlined_call_operand.vmem [shape: f32[1,256], index: 2, kind: input, shape index: {}]
  %s3 = inlined_call_operand.vmem [shape: f32[8,256], index: 3, kind: output, shape index: {}]
  %s4 = sld [smem:[#allocation0]]
  $region30: #{_lambda_.1} parent=0
    _
  %s6 = ssub.s32 1, %s4
  %s7 = scalar_select 0, %s6, %s4
  // Predicated region
  $region2: #{_lambda_.1} parent=0 // pred_check
    _
  $region3: #{_lambda_.1} parent=0 // pred_check_branch
    %9 = sbr.rel (0) target = $region5
  $region4: #{_lambda_.1} parent=0 // pred_region
    _
  $region5: #{_lambda_.1} parent=0 // pred_fallthru
    _
  // Predicated region
  $region6: #{_lambda_.1} parent=0 // pred_check
    _
  $region7: #{_lambda_.1} parent=0 // pred_check_branch
    %11 = sbr.rel (0) target = $region9
  $region8: #{_lambda_.1} parent=0 // pred_region
    _
  $region9: #{_lambda_.1} parent=0 // pred_fallthru
    _
  // Predicated region
  $region10: #{_lambda_.1} parent=0 // pred_check
    _
  $region11: #{_lambda_.1} parent=0 // pred_check_branch
    %13 = sbr.rel (0) target = $region13
  $region12: #{_lambda_.1} parent=0 // pred_region
    _
  $region13: #{_lambda_.1} parent=0 // pred_fallthru
    _
  %p14 = scmp.eq.s32.totalorder 0, 0
  // Predicated region
  $region14: #{_lambda_.1} parent=0 // pred_check
    %p15 = pneg %p14
  $region15: #{_lambda_.1} parent=0 // pred_check_branch
    %17 = sbr.rel (%p15) target = $region17
  $region16: #{_lambda_.1} parent=0 // pred_region
    %18 = vst [vmem:[%s3] sm:$0xff] 0.0
    %19 = vst [vmem:[%s3 + $0x8] sm:$0xff] 0.0
  $region17: #{_lambda_.1} parent=0 // pred_fallthru
    _
  %v20 = vld [vmem:[%s0] sm:$0xff]
  %v21 = vld [vmem:[%s0 + $0x8] sm:$0xff]
  %v22 = vld [vmem:[%s3] sm:$0xff]
  %v23 = vld [vmem:[%s3 + $0x8] sm:$0xff]
  %v24 = vld [vmem:[%s1] sm:$0xff]
  %v25 = vld [vmem:[%s1 + $0x8] sm:$0xff]
  %v26 = vld [vmem:[%s1 + $0x10] sm:$0xff]
  %v27 = vld [vmem:[%s1 + $0x18] sm:$0xff]
  %v28 = vld [vmem:[%s1 + $0x20] sm:$0xff]
  %v29 = vld [vmem:[%s1 + $0x28] sm:$0xff]
  %v30 = vld [vmem:[%s1 + $0x30] sm:$0xff]
  %v31 = vld [vmem:[%s1 + $0x38] sm:$0xff]
  %v32 = vld [vmem:[%s1 + $0x40] sm:$0xff]
  %v33 = vld [vmem:[%s1 + $0x48] sm:$0xff]
  %v34 = vld [vmem:[%s1 + $0x50] sm:$0xff]
  %v35 = vld [vmem:[%s1 + $0x58] sm:$0xff]
  %v36 = vld [vmem:[%s1 + $0x60] sm:$0xff]
  %v37 = vld [vmem:[%s1 + $0x68] sm:$0xff]
  %v38 = vld [vmem:[%s1 + $0x70] sm:$0xff]
  %v39 = vld [vmem:[%s1 + $0x78] sm:$0xff]
  %v40 = vld [vmem:[%s1 + $0x80] sm:$0xff]
  %v41 = vld [vmem:[%s1 + $0x88] sm:$0xff]
  %v42 = vld [vmem:[%s1 + $0x90] sm:$0xff]
  %v43 = vld [vmem:[%s1 + $0x98] sm:$0xff]
  %v44 = vld [vmem:[%s1 + $0xa0] sm:$0xff]
  %v45 = vld [vmem:[%s1 + $0xa8] sm:$0xff]
  %v46 = vld [vmem:[%s1 + $0xb0] sm:$0xff]
  %v47 = vld [vmem:[%s1 + $0xb8] sm:$0xff]
  %v48 = vld [vmem:[%s1 + $0xc0] sm:$0xff]
  %v49 = vld [vmem:[%s1 + $0xc8] sm:$0xff]
  %v50 = vld [vmem:[%s1 + $0xd0] sm:$0xff]
  %v51 = vld [vmem:[%s1 + $0xd8] sm:$0xff]
  %v52 = vld [vmem:[%s1 + $0xe0] sm:$0xff]
  %v53 = vld [vmem:[%s1 + $0xe8] sm:$0xff]
  %v54 = vld [vmem:[%s1 + $0xf0] sm:$0xff]
  %v55 = vld [vmem:[%s1 + $0xf8] sm:$0xff]
  %v56 = vld [vmem:[%s1 + $0x100] sm:$0xff]
  %v57 = vld [vmem:[%s1 + $0x108] sm:$0xff]
  %v58 = vld [vmem:[%s1 + $0x110] sm:$0xff]
  %v59 = vld [vmem:[%s1 + $0x118] sm:$0xff]
  %v60 = vld [vmem:[%s1 + $0x120] sm:$0xff]
  %v61 = vld [vmem:[%s1 + $0x128] sm:$0xff]
  %v62 = vld [vmem:[%s1 + $0x130] sm:$0xff]
  %v63 = vld [vmem:[%s1 + $0x138] sm:$0xff]
  %v64 = vld [vmem:[%s1 + $0x140] sm:$0xff]
  %v65 = vld [vmem:[%s1 + $0x148] sm:$0xff]
  %v66 = vld [vmem:[%s1 + $0x150] sm:$0xff]
  %v67 = vld [vmem:[%s1 + $0x158] sm:$0xff]
  %v68 = vld [vmem:[%s1 + $0x160] sm:$0xff]
  %v69 = vld [vmem:[%s1 + $0x168] sm:$0xff]
  %v70 = vld [vmem:[%s1 + $0x170] sm:$0xff]
  %v71 = vld [vmem:[%s1 + $0x178] sm:$0xff]
  %v72 = vld [vmem:[%s1 + $0x180] sm:$0xff]
  %v73 = vld [vmem:[%s1 + $0x188] sm:$0xff]
  %v74 = vld [vmem:[%s1 + $0x190] sm:$0xff]
  %v75 = vld [vmem:[%s1 + $0x198] sm:$0xff]
  %v76 = vld [vmem:[%s1 + $0x1a0] sm:$0xff]
  %v77 = vld [vmem:[%s1 + $0x1a8] sm:$0xff]
  %v78 = vld [vmem:[%s1 + $0x1b0] sm:$0xff]
  %v79 = vld [vmem:[%s1 + $0x1b8] sm:$0xff]
  %v80 = vld [vmem:[%s1 + $0x1c0] sm:$0xff]
  %v81 = vld [vmem:[%s1 + $0x1c8] sm:$0xff]
  %v82 = vld [vmem:[%s1 + $0x1d0] sm:$0xff]
  %v83 = vld [vmem:[%s1 + $0x1d8] sm:$0xff]
  %v84 = vld [vmem:[%s1 + $0x1e0] sm:$0xff]
  %v85 = vld [vmem:[%s1 + $0x1e8] sm:$0xff]
  %v86 = vld [vmem:[%s1 + $0x1f0] sm:$0xff]
  %v87 = vld [vmem:[%s1 + $0x1f8] sm:$0xff]
  %v88 = vand.u32 %v54, 4294901760
  %89 = vmatpush.msra.mxu0 %v88
  %v90 = vand.u32 %v52, 4294901760
  %91 = vmatpush.msra.mxu0 %v90
  %v92 = vand.u32 %v50, 4294901760
  %93 = vmatpush.msra.mxu0 %v92
  %v94 = vand.u32 %v48, 4294901760
  %95 = vmatpush.msra.mxu0 %v94
  %v96 = vand.u32 %v46, 4294901760
  %97 = vmatpush.msra.mxu0 %v96
  %v98 = vand.u32 %v44, 4294901760
  %99 = vmatpush.msra.mxu0 %v98
  %v100 = vand.u32 %v42, 4294901760
  %101 = vmatpush.msra.mxu0 %v100
  %v102 = vand.u32 %v40, 4294901760
  %103 = vmatpush.msra.mxu0 %v102
  %v104 = vand.u32 %v38, 4294901760
  %105 = vmatpush.msra.mxu0 %v104
  %v106 = vand.u32 %v36, 4294901760
  %107 = vmatpush.msra.mxu0 %v106
  %v108 = vand.u32 %v34, 4294901760
  %109 = vmatpush.msra.mxu0 %v108
  %v110 = vand.u32 %v32, 4294901760
  %111 = vmatpush.msra.mxu0 %v110
  %v112 = vand.u32 %v30, 4294901760
  %113 = vmatpush.msra.mxu0 %v112
  %v114 = vand.u32 %v28, 4294901760
  %115 = vmatpush.msra.mxu0 %v114
  %v116 = vand.u32 %v26, 4294901760
  %117 = vmatpush.msra.mxu0 %v116
  %v118 = vand.u32 %v24, 4294901760
  %119 = vmatpush.msra.mxu0 %v118
  %v120 = vand.u32 %v20, 4294901760
  %v121 = vsub.f32 %v20, %v120
  %v122 = vand.u32 %v121, 4294901760
  %v123 = vsub.f32 %v121, %v122
  %v124 = vand.u32 %v123, 4294901760
  %125 = vmatmul.f32.gmra.mxu0 %v124
  %v126 = vpop.f32.mrf.mxu0
  %v127 = vadd.f32 0.0, %v126
  %128 = vdwg.mxu0
  %v129 = vand.u32 %v54, 4294901760
  %v130 = vsub.f32 %v54, %v129
  %v131 = vand.u32 %v130, 4294901760
  %v132 = vsub.f32 %v130, %v131
  %v133 = vand.u32 %v132, 4294901760
  %134 = vmatpush.msra.mxu0 %v133
  %v135 = vand.u32 %v52, 4294901760
  %v136 = vsub.f32 %v52, %v135
  %v137 = vand.u32 %v136, 4294901760
  %v138 = vsub.f32 %v136, %v137
  %v139 = vand.u32 %v138, 4294901760
  %140 = vmatpush.msra.mxu0 %v139
  %v141 = vand.u32 %v50, 4294901760
  %v142 = vsub.f32 %v50, %v141
  %v143 = vand.u32 %v142, 4294901760
  %v144 = vsub.f32 %v142, %v143
  %v145 = vand.u32 %v144, 4294901760
  %146 = vmatpush.msra.mxu0 %v145
  %v147 = vand.u32 %v48, 4294901760
  %v148 = vsub.f32 %v48, %v147
  %v149 = vand.u32 %v148, 4294901760
  %v150 = vsub.f32 %v148, %v149
  %v151 = vand.u32 %v150, 4294901760
  %152 = vmatpush.msra.mxu0 %v151
  %v153 = vand.u32 %v46, 4294901760
  %v154 = vsub.f32 %v46, %v153
  %v155 = vand.u32 %v154, 4294901760
  %v156 = vsub.f32 %v154, %v155
  %v157 = vand.u32 %v156, 4294901760
  %158 = vmatpush.msra.mxu0 %v157
  %v159 = vand.u32 %v44, 4294901760
  %v160 = vsub.f32 %v44, %v159
  %v161 = vand.u32 %v160, 4294901760
  %v162 = vsub.f32 %v160, %v161
  %v163 = vand.u32 %v162, 4294901760
  %164 = vmatpush.msra.mxu0 %v163
  %v165 = vand.u32 %v42, 4294901760
  %v166 = vsub.f32 %v42, %v165
  %v167 = vand.u32 %v166, 4294901760
  %v168 = vsub.f32 %v166, %v167
  %v169 = vand.u32 %v168, 4294901760
  %170 = vmatpush.msra.mxu0 %v169
  %v171 = vand.u32 %v40, 4294901760
  %v172 = vsub.f32 %v40, %v171
  %v173 = vand.u32 %v172, 4294901760
  %v174 = vsub.f32 %v172, %v173
  %v175 = vand.u32 %v174, 4294901760
  %176 = vmatpush.msra.mxu0 %v175
  %v177 = vand.u32 %v38, 4294901760
  %v178 = vsub.f32 %v38, %v177
  %v179 = vand.u32 %v178, 4294901760
  %v180 = vsub.f32 %v178, %v179
  %v181 = vand.u32 %v180, 4294901760
  %182 = vmatpush.msra.mxu0 %v181
  %v183 = vand.u32 %v36, 4294901760
  %v184 = vsub.f32 %v36, %v183
  %v185 = vand.u32 %v184, 4294901760
  %v186 = vsub.f32 %v184, %v185
  %v187 = vand.u32 %v186, 4294901760
  %188 = vmatpush.msra.mxu0 %v187
  %v189 = vand.u32 %v34, 4294901760
  %v190 = vsub.f32 %v34, %v189
  %v191 = vand.u32 %v190, 4294901760
  %v192 = vsub.f32 %v190, %v191
  %v193 = vand.u32 %v192, 4294901760
  %194 = vmatpush.msra.mxu0 %v193
  %v195 = vand.u32 %v32, 4294901760
  %v196 = vsub.f32 %v32, %v195
  %v197 = vand.u32 %v196, 4294901760
  %v198 = vsub.f32 %v196, %v197
  %v199 = vand.u32 %v198, 4294901760
  %200 = vmatpush.msra.mxu0 %v199
  %v201 = vand.u32 %v30, 4294901760
  %v202 = vsub.f32 %v30, %v201
  %v203 = vand.u32 %v202, 4294901760
  %v204 = vsub.f32 %v202, %v203
  %v205 = vand.u32 %v204, 4294901760
  %206 = vmatpush.msra.mxu0 %v205
  %v207 = vand.u32 %v28, 4294901760
  %v208 = vsub.f32 %v28, %v207
  %v209 = vand.u32 %v208, 4294901760
  %v210 = vsub.f32 %v208, %v209
  %v211 = vand.u32 %v210, 4294901760
  %212 = vmatpush.msra.mxu0 %v211
  %v213 = vand.u32 %v26, 4294901760
  %v214 = vsub.f32 %v26, %v213
  %v215 = vand.u32 %v214, 4294901760
  %v216 = vsub.f32 %v214, %v215
  %v217 = vand.u32 %v216, 4294901760
  %218 = vmatpush.msra.mxu0 %v217
  %v219 = vand.u32 %v24, 4294901760
  %v220 = vsub.f32 %v24, %v219
  %v221 = vand.u32 %v220, 4294901760
  %v222 = vsub.f32 %v220, %v221
  %v223 = vand.u32 %v222, 4294901760
  %224 = vmatpush.msra.mxu0 %v223
  %v225 = vand.u32 %v20, 4294901760
  %226 = vmatmul.f32.gmra.mxu0 %v225
  %v227 = vpop.f32.mrf.mxu0
  %v228 = vadd.f32 %v127, %v227
  %229 = vdwg.mxu0
  %v230 = vand.u32 %v54, 4294901760
  %v231 = vsub.f32 %v54, %v230
  %232 = vmatpush.msra.mxu0 %v231
  %v233 = vand.u32 %v52, 4294901760
  %v234 = vsub.f32 %v52, %v233
  %235 = vmatpush.msra.mxu0 %v234
  %v236 = vand.u32 %v50, 4294901760
  %v237 = vsub.f32 %v50, %v236
  %238 = vmatpush.msra.mxu0 %v237
  %v239 = vand.u32 %v48, 4294901760
  %v240 = vsub.f32 %v48, %v239
  %241 = vmatpush.msra.mxu0 %v240
  %v242 = vand.u32 %v46, 4294901760
  %v243 = vsub.f32 %v46, %v242
  %244 = vmatpush.msra.mxu0 %v243
  %v245 = vand.u32 %v44, 4294901760
  %v246 = vsub.f32 %v44, %v245
  %247 = vmatpush.msra.mxu0 %v246
  %v248 = vand.u32 %v42, 4294901760
  %v249 = vsub.f32 %v42, %v248
  %250 = vmatpush.msra.mxu0 %v249
  %v251 = vand.u32 %v40, 4294901760
  %v252 = vsub.f32 %v40, %v251
  %253 = vmatpush.msra.mxu0 %v252
  %v254 = vand.u32 %v38, 4294901760
  %v255 = vsub.f32 %v38, %v254
  %256 = vmatpush.msra.mxu0 %v255
  %v257 = vand.u32 %v36, 4294901760
  %v258 = vsub.f32 %v36, %v257
  %259 = vmatpush.msra.mxu0 %v258
  %v260 = vand.u32 %v34, 4294901760
  %v261 = vsub.f32 %v34, %v260
  %262 = vmatpush.msra.mxu0 %v261
  %v263 = vand.u32 %v32, 4294901760
  %v264 = vsub.f32 %v32, %v263
  %265 = vmatpush.msra.mxu0 %v264
  %v266 = vand.u32 %v30, 4294901760
  %v267 = vsub.f32 %v30, %v266
  %268 = vmatpush.msra.mxu0 %v267
  %v269 = vand.u32 %v28, 4294901760
  %v270 = vsub.f32 %v28, %v269
  %271 = vmatpush.msra.mxu0 %v270
  %v272 = vand.u32 %v26, 4294901760
  %v273 = vsub.f32 %v26, %v272
  %274 = vmatpush.msra.mxu0 %v273
  %v275 = vand.u32 %v24, 4294901760
  %v276 = vsub.f32 %v24, %v275
  %277 = vmatpush.msra.mxu0 %v276
  %v278 = vand.u32 %v20, 4294901760
  %v279 = vsub.f32 %v20, %v278
  %280 = vmatmul.f32.gmra.mxu0 %v279
  %v281 = vpop.f32.mrf.mxu0
  %v282 = vadd.f32 %v228, %v281
  %283 = vdwg.mxu0
  %v284 = vand.u32 %v54, 4294901760
  %285 = vmatpush.msra.mxu0 %v284
  %v286 = vand.u32 %v52, 4294901760
  %287 = vmatpush.msra.mxu0 %v286
  %v288 = vand.u32 %v50, 4294901760
  %289 = vmatpush.msra.mxu0 %v288
  %v290 = vand.u32 %v48, 4294901760
  %291 = vmatpush.msra.mxu0 %v290
  %v292 = vand.u32 %v46, 4294901760
  %293 = vmatpush.msra.mxu0 %v292
  %v294 = vand.u32 %v44, 4294901760
  %295 = vmatpush.msra.mxu0 %v294
  %v296 = vand.u32 %v42, 4294901760
  %297 = vmatpush.msra.mxu0 %v296
  %v298 = vand.u32 %v40, 4294901760
  %299 = vmatpush.msra.mxu0 %v298
  %v300 = vand.u32 %v38, 4294901760
  %301 = vmatpush.msra.mxu0 %v300
  %v302 = vand.u32 %v36, 4294901760
  %303 = vmatpush.msra.mxu0 %v302
  %v304 = vand.u32 %v34, 4294901760
  %305 = vmatpush.msra.mxu0 %v304
  %v306 = vand.u32 %v32, 4294901760
  %307 = vmatpush.msra.mxu0 %v306
  %v308 = vand.u32 %v30, 4294901760
  %309 = vmatpush.msra.mxu0 %v308
  %v310 = vand.u32 %v28, 4294901760
  %311 = vmatpush.msra.mxu0 %v310
  %v312 = vand.u32 %v26, 4294901760
  %313 = vmatpush.msra.mxu0 %v312
  %v314 = vand.u32 %v24, 4294901760
  %315 = vmatpush.msra.mxu0 %v314
  %v316 = vand.u32 %v20, 4294901760
  %v317 = vsub.f32 %v20, %v316
  %v318 = vand.u32 %v317, 4294901760
  %319 = vmatmul.f32.gmra.mxu0 %v318
  %v320 = vpop.f32.mrf.mxu0
  %v321 = vadd.f32 %v282, %v320
  %322 = vdwg.mxu0
  %v323 = vand.u32 %v54, 4294901760
  %v324 = vsub.f32 %v54, %v323
  %v325 = vand.u32 %v324, 4294901760
  %326 = vmatpush.msra.mxu0 %v325
  %v327 = vand.u32 %v52, 4294901760
  %v328 = vsub.f32 %v52, %v327
  %v329 = vand.u32 %v328, 4294901760
  %330 = vmatpush.msra.mxu0 %v329
  %v331 = vand.u32 %v50, 4294901760
  %v332 = vsub.f32 %v50, %v331
  %v333 = vand.u32 %v332, 4294901760
  %334 = vmatpush.msra.mxu0 %v333
  %v335 = vand.u32 %v48, 4294901760
  %v336 = vsub.f32 %v48, %v335
  %v337 = vand.u32 %v336, 4294901760
  %338 = vmatpush.msra.mxu0 %v337
  %v339 = vand.u32 %v46, 4294901760
  %v340 = vsub.f32 %v46, %v339
  %v341 = vand.u32 %v340, 4294901760
  %342 = vmatpush.msra.mxu0 %v341
  %v343 = vand.u32 %v44, 4294901760
  %v344 = vsub.f32 %v44, %v343
  %v345 = vand.u32 %v344, 4294901760
  %346 = vmatpush.msra.mxu0 %v345
  %v347 = vand.u32 %v42, 4294901760
  %v348 = vsub.f32 %v42, %v347
  %v349 = vand.u32 %v348, 4294901760
  %350 = vmatpush.msra.mxu0 %v349
  %v351 = vand.u32 %v40, 4294901760
  %v352 = vsub.f32 %v40, %v351
  %v353 = vand.u32 %v352, 4294901760
  %354 = vmatpush.msra.mxu0 %v353
  %v355 = vand.u32 %v38, 4294901760
  %v356 = vsub.f32 %v38, %v355
  %v357 = vand.u32 %v356, 4294901760
  %358 = vmatpush.msra.mxu0 %v357
  %v359 = vand.u32 %v36, 4294901760
  %v360 = vsub.f32 %v36, %v359
  %v361 = vand.u32 %v360, 4294901760
  %362 = vmatpush.msra.mxu0 %v361
  %v363 = vand.u32 %v34, 4294901760
  %v364 = vsub.f32 %v34, %v363
  %v365 = vand.u32 %v364, 4294901760
  %366 = vmatpush.msra.mxu0 %v365
  %v367 = vand.u32 %v32, 4294901760
  %v368 = vsub.f32 %v32, %v367
  %v369 = vand.u32 %v368, 4294901760
  %370 = vmatpush.msra.mxu0 %v369
  %v371 = vand.u32 %v30, 4294901760
  %v372 = vsub.f32 %v30, %v371
  %v373 = vand.u32 %v372, 4294901760
  %374 = vmatpush.msra.mxu0 %v373
  %v375 = vand.u32 %v28, 4294901760
  %v376 = vsub.f32 %v28, %v375
  %v377 = vand.u32 %v376, 4294901760
  %378 = vmatpush.msra.mxu0 %v377
  %v379 = vand.u32 %v26, 4294901760
  %v380 = vsub.f32 %v26, %v379
  %v381 = vand.u32 %v380, 4294901760
  %382 = vmatpush.msra.mxu0 %v381
  %v383 = vand.u32 %v24, 4294901760
  %v384 = vsub.f32 %v24, %v383
  %v385 = vand.u32 %v384, 4294901760
  %386 = vmatpush.msra.mxu0 %v385
  %v387 = vand.u32 %v20, 4294901760
  %388 = vmatmul.f32.gmra.mxu0 %v387
  %v389 = vpop.f32.mrf.mxu0
  %v390 = vadd.f32 %v321, %v389
  %391 = vdwg.mxu0
  %v392 = vand.u32 %v54, 4294901760
  %393 = vmatpush.msra.mxu0 %v392
  %v394 = vand.u32 %v52, 4294901760
  %395 = vmatpush.msra.mxu0 %v394
  %v396 = vand.u32 %v50, 4294901760
  %397 = vmatpush.msra.mxu0 %v396
  %v398 = vand.u32 %v48, 4294901760
  %399 = vmatpush.msra.mxu0 %v398
  %v400 = vand.u32 %v46, 4294901760
  %401 = vmatpush.msra.mxu0 %v400
  %v402 = vand.u32 %v44, 4294901760
  %403 = vmatpush.msra.mxu0 %v402
  %v404 = vand.u32 %v42, 4294901760
  %405 = vmatpush.msra.mxu0 %v404
  %v406 = vand.u32 %v40, 4294901760
  %407 = vmatpush.msra.mxu0 %v406
  %v408 = vand.u32 %v38, 4294901760
  %409 = vmatpush.msra.mxu0 %v408
  %v410 = vand.u32 %v36, 4294901760
  %411 = vmatpush.msra.mxu0 %v410
  %v412 = vand.u32 %v34, 4294901760
  %413 = vmatpush.msra.mxu0 %v412
  %v414 = vand.u32 %v32, 4294901760
  %415 = vmatpush.msra.mxu0 %v414
  %v416 = vand.u32 %v30, 4294901760
  %417 = vmatpush.msra.mxu0 %v416
  %v418 = vand.u32 %v28, 4294901760
  %419 = vmatpush.msra.mxu0 %v418
  %v420 = vand.u32 %v26, 4294901760
  %421 = vmatpush.msra.mxu0 %v420
  %v422 = vand.u32 %v24, 4294901760
  %423 = vmatpush.msra.mxu0 %v422
  %v424 = vand.u32 %v20, 4294901760
  %425 = vmatmul.f32.gmra.mxu0 %v424
  %v426 = vpop.f32.mrf.mxu0
  %v427 = vadd.f32 %v390, %v426
  %428 = vdwg.mxu0
  %v429 = vand.u32 %v86, 4294901760
  %430 = vmatpush.msra.mxu0 %v429
  %v431 = vand.u32 %v84, 4294901760
  %432 = vmatpush.msra.mxu0 %v431
  %v433 = vand.u32 %v82, 4294901760
  %434 = vmatpush.msra.mxu0 %v433
  %v435 = vand.u32 %v80, 4294901760
  %436 = vmatpush.msra.mxu0 %v435
  %v437 = vand.u32 %v78, 4294901760
  %438 = vmatpush.msra.mxu0 %v437
  %v439 = vand.u32 %v76, 4294901760
  %440 = vmatpush.msra.mxu0 %v439
  %v441 = vand.u32 %v74, 4294901760
  %442 = vmatpush.msra.mxu0 %v441
  %v443 = vand.u32 %v72, 4294901760
  %444 = vmatpush.msra.mxu0 %v443
  %v445 = vand.u32 %v70, 4294901760
  %446 = vmatpush.msra.mxu0 %v445
  %v447 = vand.u32 %v68, 4294901760
  %448 = vmatpush.msra.mxu0 %v447
  %v449 = vand.u32 %v66, 4294901760
  %450 = vmatpush.msra.mxu0 %v449
  %v451 = vand.u32 %v64, 4294901760
  %452 = vmatpush.msra.mxu0 %v451
  %v453 = vand.u32 %v62, 4294901760
  %454 = vmatpush.msra.mxu0 %v453
  %v455 = vand.u32 %v60, 4294901760
  %456 = vmatpush.msra.mxu0 %v455
  %v457 = vand.u32 %v58, 4294901760
  %458 = vmatpush.msra.mxu0 %v457
  %v459 = vand.u32 %v56, 4294901760
  %460 = vmatpush.msra.mxu0 %v459
  %v461 = vand.u32 %v21, 4294901760
  %v462 = vsub.f32 %v21, %v461
  %v463 = vand.u32 %v462, 4294901760
  %v464 = vsub.f32 %v462, %v463
  %v465 = vand.u32 %v464, 4294901760
  %466 = vmatmul.f32.gmra.mxu0 %v465
  %v467 = vpop.f32.mrf.mxu0
  %v468 = vadd.f32 %v427, %v467
  %469 = vdwg.mxu0
  %v470 = vand.u32 %v86, 4294901760
  %v471 = vsub.f32 %v86, %v470
  %v472 = vand.u32 %v471, 4294901760
  %v473 = vsub.f32 %v471, %v472
  %v474 = vand.u32 %v473, 4294901760
  %475 = vmatpush.msra.mxu0 %v474
  %v476 = vand.u32 %v84, 4294901760
  %v477 = vsub.f32 %v84, %v476
  %v478 = vand.u32 %v477, 4294901760
  %v479 = vsub.f32 %v477, %v478
  %v480 = vand.u32 %v479, 4294901760
  %481 = vmatpush.msra.mxu0 %v480
  %v482 = vand.u32 %v82, 4294901760
  %v483 = vsub.f32 %v82, %v482
  %v484 = vand.u32 %v483, 4294901760
  %v485 = vsub.f32 %v483, %v484
  %v486 = vand.u32 %v485, 4294901760
  %487 = vmatpush.msra.mxu0 %v486
  %v488 = vand.u32 %v80, 4294901760
  %v489 = vsub.f32 %v80, %v488
  %v490 = vand.u32 %v489, 4294901760
  %v491 = vsub.f32 %v489, %v490
  %v492 = vand.u32 %v491, 4294901760
  %493 = vmatpush.msra.mxu0 %v492
  %v494 = vand.u32 %v78, 4294901760
  %v495 = vsub.f32 %v78, %v494
  %v496 = vand.u32 %v495, 4294901760
  %v497 = vsub.f32 %v495, %v496
  %v498 = vand.u32 %v497, 4294901760
  %499 = vmatpush.msra.mxu0 %v498
  %v500 = vand.u32 %v76, 4294901760
  %v501 = vsub.f32 %v76, %v500
  %v502 = vand.u32 %v501, 4294901760
  %v503 = vsub.f32 %v501, %v502
  %v504 = vand.u32 %v503, 4294901760
  %505 = vmatpush.msra.mxu0 %v504
  %v506 = vand.u32 %v74, 4294901760
  %v507 = vsub.f32 %v74, %v506
  %v508 = vand.u32 %v507, 4294901760
  %v509 = vsub.f32 %v507, %v508
  %v510 = vand.u32 %v509, 4294901760
  %511 = vmatpush.msra.mxu0 %v510
  %v512 = vand.u32 %v72, 4294901760
  %v513 = vsub.f32 %v72, %v512
  %v514 = vand.u32 %v513, 4294901760
  %v515 = vsub.f32 %v513, %v514
  %v516 = vand.u32 %v515, 4294901760
  %517 = vmatpush.msra.mxu0 %v516
  %v518 = vand.u32 %v70, 4294901760
  %v519 = vsub.f32 %v70, %v518
  %v520 = vand.u32 %v519, 4294901760
  %v521 = vsub.f32 %v519, %v520
  %v522 = vand.u32 %v521, 4294901760
  %523 = vmatpush.msra.mxu0 %v522
  %v524 = vand.u32 %v68, 4294901760
  %v525 = vsub.f32 %v68, %v524
  %v526 = vand.u32 %v525, 4294901760
  %v527 = vsub.f32 %v525, %v526
  %v528 = vand.u32 %v527, 4294901760
  %529 = vmatpush.msra.mxu0 %v528
  %v530 = vand.u32 %v66, 4294901760
  %v531 = vsub.f32 %v66, %v530
  %v532 = vand.u32 %v531, 4294901760
  %v533 = vsub.f32 %v531, %v532
  %v534 = vand.u32 %v533, 4294901760
  %535 = vmatpush.msra.mxu0 %v534
  %v536 = vand.u32 %v64, 4294901760
  %v537 = vsub.f32 %v64, %v536
  %v538 = vand.u32 %v537, 4294901760
  %v539 = vsub.f32 %v537, %v538
  %v540 = vand.u32 %v539, 4294901760
  %541 = vmatpush.msra.mxu0 %v540
  %v542 = vand.u32 %v62, 4294901760
  %v543 = vsub.f32 %v62, %v542
  %v544 = vand.u32 %v543, 4294901760
  %v545 = vsub.f32 %v543, %v544
  %v546 = vand.u32 %v545, 4294901760
  %547 = vmatpush.msra.mxu0 %v546
  %v548 = vand.u32 %v60, 4294901760
  %v549 = vsub.f32 %v60, %v548
  %v550 = vand.u32 %v549, 4294901760
  %v551 = vsub.f32 %v549, %v550
  %v552 = vand.u32 %v551, 4294901760
  %553 = vmatpush.msra.mxu0 %v552
  %v554 = vand.u32 %v58, 4294901760
  %v555 = vsub.f32 %v58, %v554
  %v556 = vand.u32 %v555, 4294901760
  %v557 = vsub.f32 %v555, %v556
  %v558 = vand.u32 %v557, 4294901760
  %559 = vmatpush.msra.mxu0 %v558
  %v560 = vand.u32 %v56, 4294901760
  %v561 = vsub.f32 %v56, %v560
  %v562 = vand.u32 %v561, 4294901760
  %v563 = vsub.f32 %v561, %v562
  %v564 = vand.u32 %v563, 4294901760
  %565 = vmatpush.msra.mxu0 %v564
  %v566 = vand.u32 %v21, 4294901760
  %567 = vmatmul.f32.gmra.mxu0 %v566
  %v568 = vpop.f32.mrf.mxu0
  %v569 = vadd.f32 %v468, %v568
  %570 = vdwg.mxu0
  %v571 = vand.u32 %v86, 4294901760
  %v572 = vsub.f32 %v86, %v571
  %573 = vmatpush.msra.mxu0 %v572
  %v574 = vand.u32 %v84, 4294901760
  %v575 = vsub.f32 %v84, %v574
  %576 = vmatpush.msra.mxu0 %v575
  %v577 = vand.u32 %v82, 4294901760
  %v578 = vsub.f32 %v82, %v577
  %579 = vmatpush.msra.mxu0 %v578
  %v580 = vand.u32 %v80, 4294901760
  %v581 = vsub.f32 %v80, %v580
  %582 = vmatpush.msra.mxu0 %v581
  %v583 = vand.u32 %v78, 4294901760
  %v584 = vsub.f32 %v78, %v583
  %585 = vmatpush.msra.mxu0 %v584
  %v586 = vand.u32 %v76, 4294901760
  %v587 = vsub.f32 %v76, %v586
  %588 = vmatpush.msra.mxu0 %v587
  %v589 = vand.u32 %v74, 4294901760
  %v590 = vsub.f32 %v74, %v589
  %591 = vmatpush.msra.mxu0 %v590
  %v592 = vand.u32 %v72, 4294901760
  %v593 = vsub.f32 %v72, %v592
  %594 = vmatpush.msra.mxu0 %v593
  %v595 = vand.u32 %v70, 4294901760
  %v596 = vsub.f32 %v70, %v595
  %597 = vmatpush.msra.mxu0 %v596
  %v598 = vand.u32 %v68, 4294901760
  %v599 = vsub.f32 %v68, %v598
  %600 = vmatpush.msra.mxu0 %v599
  %v601 = vand.u32 %v66, 4294901760
  %v602 = vsub.f32 %v66, %v601
  %603 = vmatpush.msra.mxu0 %v602
  %v604 = vand.u32 %v64, 4294901760
  %v605 = vsub.f32 %v64, %v604
  %606 = vmatpush.msra.mxu0 %v605
  %v607 = vand.u32 %v62, 4294901760
  %v608 = vsub.f32 %v62, %v607
  %609 = vmatpush.msra.mxu0 %v608
  %v610 = vand.u32 %v60, 4294901760
  %v611 = vsub.f32 %v60, %v610
  %612 = vmatpush.msra.mxu0 %v611
  %v613 = vand.u32 %v58, 4294901760
  %v614 = vsub.f32 %v58, %v613
  %615 = vmatpush.msra.mxu0 %v614
  %v616 = vand.u32 %v56, 4294901760
  %v617 = vsub.f32 %v56, %v616
  %618 = vmatpush.msra.mxu0 %v617
  %v619 = vand.u32 %v21, 4294901760
  %v620 = vsub.f32 %v21, %v619
  %621 = vmatmul.f32.gmra.mxu0 %v620
  %v622 = vpop.f32.mrf.mxu0
  %v623 = vadd.f32 %v569, %v622
  %624 = vdwg.mxu0
  %v625 = vand.u32 %v86, 4294901760
  %626 = vmatpush.msra.mxu0 %v625
  %v627 = vand.u32 %v84, 4294901760
  %628 = vmatpush.msra.mxu0 %v627
  %v629 = vand.u32 %v82, 4294901760
  %630 = vmatpush.msra.mxu0 %v629
  %v631 = vand.u32 %v80, 4294901760
  %632 = vmatpush.msra.mxu0 %v631
  %v633 = vand.u32 %v78, 4294901760
  %634 = vmatpush.msra.mxu0 %v633
  %v635 = vand.u32 %v76, 4294901760
  %636 = vmatpush.msra.mxu0 %v635
  %v637 = vand.u32 %v74, 4294901760
  %638 = vmatpush.msra.mxu0 %v637
  %v639 = vand.u32 %v72, 4294901760
  %640 = vmatpush.msra.mxu0 %v639
  %v641 = vand.u32 %v70, 4294901760
  %642 = vmatpush.msra.mxu0 %v641
  %v643 = vand.u32 %v68, 4294901760
  %644 = vmatpush.msra.mxu0 %v643
  %v645 = vand.u32 %v66, 4294901760
  %646 = vmatpush.msra.mxu0 %v645
  %v647 = vand.u32 %v64, 4294901760
  %648 = vmatpush.msra.mxu0 %v647
  %v649 = vand.u32 %v62, 4294901760
  %650 = vmatpush.msra.mxu0 %v649
  %v651 = vand.u32 %v60, 4294901760
  %652 = vmatpush.msra.mxu0 %v651
  %v653 = vand.u32 %v58, 4294901760
  %654 = vmatpush.msra.mxu0 %v653
  %v655 = vand.u32 %v56, 4294901760
  %656 = vmatpush.msra.mxu0 %v655
  %v657 = vand.u32 %v21, 4294901760
  %v658 = vsub.f32 %v21, %v657
  %v659 = vand.u32 %v658, 4294901760
  %660 = vmatmul.f32.gmra.mxu0 %v659
  %v661 = vpop.f32.mrf.mxu0
  %v662 = vadd.f32 %v623, %v661
  %663 = vdwg.mxu0
  %v664 = vand.u32 %v86, 4294901760
  %v665 = vsub.f32 %v86, %v664
  %v666 = vand.u32 %v665, 4294901760
  %667 = vmatpush.msra.mxu0 %v666
  %v668 = vand.u32 %v84, 4294901760
  %v669 = vsub.f32 %v84, %v668
  %v670 = vand.u32 %v669, 4294901760
  %671 = vmatpush.msra.mxu0 %v670
  %v672 = vand.u32 %v82, 4294901760
  %v673 = vsub.f32 %v82, %v672
  %v674 = vand.u32 %v673, 4294901760
  %675 = vmatpush.msra.mxu0 %v674
  %v676 = vand.u32 %v80, 4294901760
  %v677 = vsub.f32 %v80, %v676
  %v678 = vand.u32 %v677, 4294901760
  %679 = vmatpush.msra.mxu0 %v678
  %v680 = vand.u32 %v78, 4294901760
  %v681 = vsub.f32 %v78, %v680
  %v682 = vand.u32 %v681, 4294901760
  %683 = vmatpush.msra.mxu0 %v682
  %v684 = vand.u32 %v76, 4294901760
  %v685 = vsub.f32 %v76, %v684
  %v686 = vand.u32 %v685, 4294901760
  %687 = vmatpush.msra.mxu0 %v686
  %v688 = vand.u32 %v74, 4294901760
  %v689 = vsub.f32 %v74, %v688
  %v690 = vand.u32 %v689, 4294901760
  %691 = vmatpush.msra.mxu0 %v690
  %v692 = vand.u32 %v72, 4294901760
  %v693 = vsub.f32 %v72, %v692
  %v694 = vand.u32 %v693, 4294901760
  %695 = vmatpush.msra.mxu0 %v694
  %v696 = vand.u32 %v70, 4294901760
  %v697 = vsub.f32 %v70, %v696
  %v698 = vand.u32 %v697, 4294901760
  %699 = vmatpush.msra.mxu0 %v698
  %v700 = vand.u32 %v68, 4294901760
  %v701 = vsub.f32 %v68, %v700
  %v702 = vand.u32 %v701, 4294901760
  %703 = vmatpush.msra.mxu0 %v702
  %v704 = vand.u32 %v66, 4294901760
  %v705 = vsub.f32 %v66, %v704
  %v706 = vand.u32 %v705, 4294901760
  %707 = vmatpush.msra.mxu0 %v706
  %v708 = vand.u32 %v64, 4294901760
  %v709 = vsub.f32 %v64, %v708
  %v710 = vand.u32 %v709, 4294901760
  %711 = vmatpush.msra.mxu0 %v710
  %v712 = vand.u32 %v62, 4294901760
  %v713 = vsub.f32 %v62, %v712
  %v714 = vand.u32 %v713, 4294901760
  %715 = vmatpush.msra.mxu0 %v714
  %v716 = vand.u32 %v60, 4294901760
  %v717 = vsub.f32 %v60, %v716
  %v718 = vand.u32 %v717, 4294901760
  %719 = vmatpush.msra.mxu0 %v718
  %v720 = vand.u32 %v58, 4294901760
  %v721 = vsub.f32 %v58, %v720
  %v722 = vand.u32 %v721, 4294901760
  %723 = vmatpush.msra.mxu0 %v722
  %v724 = vand.u32 %v56, 4294901760
  %v725 = vsub.f32 %v56, %v724
  %v726 = vand.u32 %v725, 4294901760
  %727 = vmatpush.msra.mxu0 %v726
  %v728 = vand.u32 %v21, 4294901760
  %729 = vmatmul.f32.gmra.mxu0 %v728
  %v730 = vpop.f32.mrf.mxu0
  %v731 = vadd.f32 %v662, %v730
  %732 = vdwg.mxu0
  %v733 = vand.u32 %v86, 4294901760
  %734 = vmatpush.msra.mxu0 %v733
  %v735 = vand.u32 %v84, 4294901760
  %736 = vmatpush.msra.mxu0 %v735
  %v737 = vand.u32 %v82, 4294901760
  %738 = vmatpush.msra.mxu0 %v737
  %v739 = vand.u32 %v80, 4294901760
  %740 = vmatpush.msra.mxu0 %v739
  %v741 = vand.u32 %v78, 4294901760
  %742 = vmatpush.msra.mxu0 %v741
  %v743 = vand.u32 %v76, 4294901760
  %744 = vmatpush.msra.mxu0 %v743
  %v745 = vand.u32 %v74, 4294901760
  %746 = vmatpush.msra.mxu0 %v745
  %v747 = vand.u32 %v72, 4294901760
  %748 = vmatpush.msra.mxu0 %v747
  %v749 = vand.u32 %v70, 4294901760
  %750 = vmatpush.msra.mxu0 %v749
  %v751 = vand.u32 %v68, 4294901760
  %752 = vmatpush.msra.mxu0 %v751
  %v753 = vand.u32 %v66, 4294901760
  %754 = vmatpush.msra.mxu0 %v753
  %v755 = vand.u32 %v64, 4294901760
  %756 = vmatpush.msra.mxu0 %v755
  %v757 = vand.u32 %v62, 4294901760
  %758 = vmatpush.msra.mxu0 %v757
  %v759 = vand.u32 %v60, 4294901760
  %760 = vmatpush.msra.mxu0 %v759
  %v761 = vand.u32 %v58, 4294901760
  %762 = vmatpush.msra.mxu0 %v761
  %v763 = vand.u32 %v56, 4294901760
  %764 = vmatpush.msra.mxu0 %v763
  %v765 = vand.u32 %v21, 4294901760
  %766 = vmatmul.f32.gmra.mxu0 %v765
  %v767 = vpop.f32.mrf.mxu0
  %v768 = vadd.f32 %v731, %v767
  %769 = vdwg.mxu0
  %v770 = vand.u32 %v55, 4294901760
  %771 = vmatpush.msra.mxu0 %v770
  %v772 = vand.u32 %v53, 4294901760
  %773 = vmatpush.msra.mxu0 %v772
  %v774 = vand.u32 %v51, 4294901760
  %775 = vmatpush.msra.mxu0 %v774
  %v776 = vand.u32 %v49, 4294901760
  %777 = vmatpush.msra.mxu0 %v776
  %v778 = vand.u32 %v47, 4294901760
  %779 = vmatpush.msra.mxu0 %v778
  %v780 = vand.u32 %v45, 4294901760
  %781 = vmatpush.msra.mxu0 %v780
  %v782 = vand.u32 %v43, 4294901760
  %783 = vmatpush.msra.mxu0 %v782
  %v784 = vand.u32 %v41, 4294901760
  %785 = vmatpush.msra.mxu0 %v784
  %v786 = vand.u32 %v39, 4294901760
  %787 = vmatpush.msra.mxu0 %v786
  %v788 = vand.u32 %v37, 4294901760
  %789 = vmatpush.msra.mxu0 %v788
  %v790 = vand.u32 %v35, 4294901760
  %791 = vmatpush.msra.mxu0 %v790
  %v792 = vand.u32 %v33, 4294901760
  %793 = vmatpush.msra.mxu0 %v792
  %v794 = vand.u32 %v31, 4294901760
  %795 = vmatpush.msra.mxu0 %v794
  %v796 = vand.u32 %v29, 4294901760
  %797 = vmatpush.msra.mxu0 %v796
  %v798 = vand.u32 %v27, 4294901760
  %799 = vmatpush.msra.mxu0 %v798
  %v800 = vand.u32 %v25, 4294901760
  %801 = vmatpush.msra.mxu0 %v800
  %v802 = vand.u32 %v20, 4294901760
  %v803 = vsub.f32 %v20, %v802
  %v804 = vand.u32 %v803, 4294901760
  %v805 = vsub.f32 %v803, %v804
  %v806 = vand.u32 %v805, 4294901760
  %807 = vmatmul.f32.gmra.mxu0 %v806
  %v808 = vpop.f32.mrf.mxu0
  %v809 = vadd.f32 0.0, %v808
  %810 = vdwg.mxu0
  %v811 = vand.u32 %v55, 4294901760
  %v812 = vsub.f32 %v55, %v811
  %v813 = vand.u32 %v812, 4294901760
  %v814 = vsub.f32 %v812, %v813
  %v815 = vand.u32 %v814, 4294901760
  %816 = vmatpush.msra.mxu0 %v815
  %v817 = vand.u32 %v53, 4294901760
  %v818 = vsub.f32 %v53, %v817
  %v819 = vand.u32 %v818, 4294901760
  %v820 = vsub.f32 %v818, %v819
  %v821 = vand.u32 %v820, 4294901760
  %822 = vmatpush.msra.mxu0 %v821
  %v823 = vand.u32 %v51, 4294901760
  %v824 = vsub.f32 %v51, %v823
  %v825 = vand.u32 %v824, 4294901760
  %v826 = vsub.f32 %v824, %v825
  %v827 = vand.u32 %v826, 4294901760
  %828 = vmatpush.msra.mxu0 %v827
  %v829 = vand.u32 %v49, 4294901760
  %v830 = vsub.f32 %v49, %v829
  %v831 = vand.u32 %v830, 4294901760
  %v832 = vsub.f32 %v830, %v831
  %v833 = vand.u32 %v832, 4294901760
  %834 = vmatpush.msra.mxu0 %v833
  %v835 = vand.u32 %v47, 4294901760
  %v836 = vsub.f32 %v47, %v835
  %v837 = vand.u32 %v836, 4294901760
  %v838 = vsub.f32 %v836, %v837
  %v839 = vand.u32 %v838, 4294901760
  %840 = vmatpush.msra.mxu0 %v839
  %v841 = vand.u32 %v45, 4294901760
  %v842 = vsub.f32 %v45, %v841
  %v843 = vand.u32 %v842, 4294901760
  %v844 = vsub.f32 %v842, %v843
  %v845 = vand.u32 %v844, 4294901760
  %846 = vmatpush.msra.mxu0 %v845
  %v847 = vand.u32 %v43, 4294901760
  %v848 = vsub.f32 %v43, %v847
  %v849 = vand.u32 %v848, 4294901760
  %v850 = vsub.f32 %v848, %v849
  %v851 = vand.u32 %v850, 4294901760
  %852 = vmatpush.msra.mxu0 %v851
  %v853 = vand.u32 %v41, 4294901760
  %v854 = vsub.f32 %v41, %v853
  %v855 = vand.u32 %v854, 4294901760
  %v856 = vsub.f32 %v854, %v855
  %v857 = vand.u32 %v856, 4294901760
  %858 = vmatpush.msra.mxu0 %v857
  %v859 = vand.u32 %v39, 4294901760
  %v860 = vsub.f32 %v39, %v859
  %v861 = vand.u32 %v860, 4294901760
  %v862 = vsub.f32 %v860, %v861
  %v863 = vand.u32 %v862, 4294901760
  %864 = vmatpush.msra.mxu0 %v863
  %v865 = vand.u32 %v37, 4294901760
  %v866 = vsub.f32 %v37, %v865
  %v867 = vand.u32 %v866, 4294901760
  %v868 = vsub.f32 %v866, %v867
  %v869 = vand.u32 %v868, 4294901760
  %870 = vmatpush.msra.mxu0 %v869
  %v871 = vand.u32 %v35, 4294901760
  %v872 = vsub.f32 %v35, %v871
  %v873 = vand.u32 %v872, 4294901760
  %v874 = vsub.f32 %v872, %v873
  %v875 = vand.u32 %v874, 4294901760
  %876 = vmatpush.msra.mxu0 %v875
  %v877 = vand.u32 %v33, 4294901760
  %v878 = vsub.f32 %v33, %v877
  %v879 = vand.u32 %v878, 4294901760
  %v880 = vsub.f32 %v878, %v879
  %v881 = vand.u32 %v880, 4294901760
  %882 = vmatpush.msra.mxu0 %v881
  %v883 = vand.u32 %v31, 4294901760
  %v884 = vsub.f32 %v31, %v883
  %v885 = vand.u32 %v884, 4294901760
  %v886 = vsub.f32 %v884, %v885
  %v887 = vand.u32 %v886, 4294901760
  %888 = vmatpush.msra.mxu0 %v887
  %v889 = vand.u32 %v29, 4294901760
  %v890 = vsub.f32 %v29, %v889
  %v891 = vand.u32 %v890, 4294901760
  %v892 = vsub.f32 %v890, %v891
  %v893 = vand.u32 %v892, 4294901760
  %894 = vmatpush.msra.mxu0 %v893
  %v895 = vand.u32 %v27, 4294901760
  %v896 = vsub.f32 %v27, %v895
  %v897 = vand.u32 %v896, 4294901760
  %v898 = vsub.f32 %v896, %v897
  %v899 = vand.u32 %v898, 4294901760
  %900 = vmatpush.msra.mxu0 %v899
  %v901 = vand.u32 %v25, 4294901760
  %v902 = vsub.f32 %v25, %v901
  %v903 = vand.u32 %v902, 4294901760
  %v904 = vsub.f32 %v902, %v903
  %v905 = vand.u32 %v904, 4294901760
  %906 = vmatpush.msra.mxu0 %v905
  %v907 = vand.u32 %v20, 4294901760
  %908 = vmatmul.f32.gmra.mxu0 %v907
  %v909 = vpop.f32.mrf.mxu0
  %v910 = vadd.f32 %v809, %v909
  %911 = vdwg.mxu0
  %v912 = vand.u32 %v55, 4294901760
  %v913 = vsub.f32 %v55, %v912
  %914 = vmatpush.msra.mxu0 %v913
  %v915 = vand.u32 %v53, 4294901760
  %v916 = vsub.f32 %v53, %v915
  %917 = vmatpush.msra.mxu0 %v916
  %v918 = vand.u32 %v51, 4294901760
  %v919 = vsub.f32 %v51, %v918
  %920 = vmatpush.msra.mxu0 %v919
  %v921 = vand.u32 %v49, 4294901760
  %v922 = vsub.f32 %v49, %v921
  %923 = vmatpush.msra.mxu0 %v922
  %v924 = vand.u32 %v47, 4294901760
  %v925 = vsub.f32 %v47, %v924
  %926 = vmatpush.msra.mxu0 %v925
  %v927 = vand.u32 %v45, 4294901760
  %v928 = vsub.f32 %v45, %v927
  %929 = vmatpush.msra.mxu0 %v928
  %v930 = vand.u32 %v43, 4294901760
  %v931 = vsub.f32 %v43, %v930
  %932 = vmatpush.msra.mxu0 %v931
  %v933 = vand.u32 %v41, 4294901760
  %v934 = vsub.f32 %v41, %v933
  %935 = vmatpush.msra.mxu0 %v934
  %v936 = vand.u32 %v39, 4294901760
  %v937 = vsub.f32 %v39, %v936
  %938 = vmatpush.msra.mxu0 %v937
  %v939 = vand.u32 %v37, 4294901760
  %v940 = vsub.f32 %v37, %v939
  %941 = vmatpush.msra.mxu0 %v940
  %v942 = vand.u32 %v35, 4294901760
  %v943 = vsub.f32 %v35, %v942
  %944 = vmatpush.msra.mxu0 %v943
  %v945 = vand.u32 %v33, 4294901760
  %v946 = vsub.f32 %v33, %v945
  %947 = vmatpush.msra.mxu0 %v946
  %v948 = vand.u32 %v31, 4294901760
  %v949 = vsub.f32 %v31, %v948
  %950 = vmatpush.msra.mxu0 %v949
  %v951 = vand.u32 %v29, 4294901760
  %v952 = vsub.f32 %v29, %v951
  %953 = vmatpush.msra.mxu0 %v952
  %v954 = vand.u32 %v27, 4294901760
  %v955 = vsub.f32 %v27, %v954
  %956 = vmatpush.msra.mxu0 %v955
  %v957 = vand.u32 %v25, 4294901760
  %v958 = vsub.f32 %v25, %v957
  %959 = vmatpush.msra.mxu0 %v958
  %v960 = vand.u32 %v20, 4294901760
  %v961 = vsub.f32 %v20, %v960
  %962 = vmatmul.f32.gmra.mxu0 %v961
  %v963 = vpop.f32.mrf.mxu0
  %v964 = vadd.f32 %v910, %v963
  %965 = vdwg.mxu0
  %v966 = vand.u32 %v55, 4294901760
  %967 = vmatpush.msra.mxu0 %v966
  %v968 = vand.u32 %v53, 4294901760
  %969 = vmatpush.msra.mxu0 %v968
  %v970 = vand.u32 %v51, 4294901760
  %971 = vmatpush.msra.mxu0 %v970
  %v972 = vand.u32 %v49, 4294901760
  %973 = vmatpush.msra.mxu0 %v972
  %v974 = vand.u32 %v47, 4294901760
  %975 = vmatpush.msra.mxu0 %v974
  %v976 = vand.u32 %v45, 4294901760
  %977 = vmatpush.msra.mxu0 %v976
  %v978 = vand.u32 %v43, 4294901760
  %979 = vmatpush.msra.mxu0 %v978
  %v980 = vand.u32 %v41, 4294901760
  %981 = vmatpush.msra.mxu0 %v980
  %v982 = vand.u32 %v39, 4294901760
  %983 = vmatpush.msra.mxu0 %v982
  %v984 = vand.u32 %v37, 4294901760
  %985 = vmatpush.msra.mxu0 %v984
  %v986 = vand.u32 %v35, 4294901760
  %987 = vmatpush.msra.mxu0 %v986
  %v988 = vand.u32 %v33, 4294901760
  %989 = vmatpush.msra.mxu0 %v988
  %v990 = vand.u32 %v31, 4294901760
  %991 = vmatpush.msra.mxu0 %v990
  %v992 = vand.u32 %v29, 4294901760
  %993 = vmatpush.msra.mxu0 %v992
  %v994 = vand.u32 %v27, 4294901760
  %995 = vmatpush.msra.mxu0 %v994
  %v996 = vand.u32 %v25, 4294901760
  %997 = vmatpush.msra.mxu0 %v996
  %v998 = vand.u32 %v20, 4294901760
  %v999 = vsub.f32 %v20, %v998
  %v1000 = vand.u32 %v999, 4294901760
  %1001 = vmatmul.f32.gmra.mxu0 %v1000
  %v1002 = vpop.f32.mrf.mxu0
  %v1003 = vadd.f32 %v964, %v1002
  %1004 = vdwg.mxu0
  %v1005 = vand.u32 %v55, 4294901760
  %v1006 = vsub.f32 %v55, %v1005
  %v1007 = vand.u32 %v1006, 4294901760
  %1008 = vmatpush.msra.mxu0 %v1007
  %v1009 = vand.u32 %v53, 4294901760
  %v1010 = vsub.f32 %v53, %v1009
  %v1011 = vand.u32 %v1010, 4294901760
  %1012 = vmatpush.msra.mxu0 %v1011
  %v1013 = vand.u32 %v51, 4294901760
  %v1014 = vsub.f32 %v51, %v1013
  %v1015 = vand.u32 %v1014, 4294901760
  %1016 = vmatpush.msra.mxu0 %v1015
  %v1017 = vand.u32 %v49, 4294901760
  %v1018 = vsub.f32 %v49, %v1017
  %v1019 = vand.u32 %v1018, 4294901760
  %1020 = vmatpush.msra.mxu0 %v1019
  %v1021 = vand.u32 %v47, 4294901760
  %v1022 = vsub.f32 %v47, %v1021
  %v1023 = vand.u32 %v1022, 4294901760
  %1024 = vmatpush.msra.mxu0 %v1023
  %v1025 = vand.u32 %v45, 4294901760
  %v1026 = vsub.f32 %v45, %v1025
  %v1027 = vand.u32 %v1026, 4294901760
  %1028 = vmatpush.msra.mxu0 %v1027
  %v1029 = vand.u32 %v43, 4294901760
  %v1030 = vsub.f32 %v43, %v1029
  %v1031 = vand.u32 %v1030, 4294901760
  %1032 = vmatpush.msra.mxu0 %v1031
  %v1033 = vand.u32 %v41, 4294901760
  %v1034 = vsub.f32 %v41, %v1033
  %v1035 = vand.u32 %v1034, 4294901760
  %1036 = vmatpush.msra.mxu0 %v1035
  %v1037 = vand.u32 %v39, 4294901760
  %v1038 = vsub.f32 %v39, %v1037
  %v1039 = vand.u32 %v1038, 4294901760
  %1040 = vmatpush.msra.mxu0 %v1039
  %v1041 = vand.u32 %v37, 4294901760
  %v1042 = vsub.f32 %v37, %v1041
  %v1043 = vand.u32 %v1042, 4294901760
  %1044 = vmatpush.msra.mxu0 %v1043
  %v1045 = vand.u32 %v35, 4294901760
  %v1046 = vsub.f32 %v35, %v1045
  %v1047 = vand.u32 %v1046, 4294901760
  %1048 = vmatpush.msra.mxu0 %v1047
  %v1049 = vand.u32 %v33, 4294901760
  %v1050 = vsub.f32 %v33, %v1049
  %v1051 = vand.u32 %v1050, 4294901760
  %1052 = vmatpush.msra.mxu0 %v1051
  %v1053 = vand.u32 %v31, 4294901760
  %v1054 = vsub.f32 %v31, %v1053
  %v1055 = vand.u32 %v1054, 4294901760
  %1056 = vmatpush.msra.mxu0 %v1055
  %v1057 = vand.u32 %v29, 4294901760
  %v1058 = vsub.f32 %v29, %v1057
  %v1059 = vand.u32 %v1058, 4294901760
  %1060 = vmatpush.msra.mxu0 %v1059
  %v1061 = vand.u32 %v27, 4294901760
  %v1062 = vsub.f32 %v27, %v1061
  %v1063 = vand.u32 %v1062, 4294901760
  %1064 = vmatpush.msra.mxu0 %v1063
  %v1065 = vand.u32 %v25, 4294901760
  %v1066 = vsub.f32 %v25, %v1065
  %v1067 = vand.u32 %v1066, 4294901760
  %1068 = vmatpush.msra.mxu0 %v1067
  %v1069 = vand.u32 %v20, 4294901760
  %1070 = vmatmul.f32.gmra.mxu0 %v1069
  %v1071 = vpop.f32.mrf.mxu0
  %v1072 = vadd.f32 %v1003, %v1071
  %1073 = vdwg.mxu0
  %v1074 = vand.u32 %v55, 4294901760
  %1075 = vmatpush.msra.mxu0 %v1074
  %v1076 = vand.u32 %v53, 4294901760
  %1077 = vmatpush.msra.mxu0 %v1076
  %v1078 = vand.u32 %v51, 4294901760
  %1079 = vmatpush.msra.mxu0 %v1078
  %v1080 = vand.u32 %v49, 4294901760
  %1081 = vmatpush.msra.mxu0 %v1080
  %v1082 = vand.u32 %v47, 4294901760
  %1083 = vmatpush.msra.mxu0 %v1082
  %v1084 = vand.u32 %v45, 4294901760
  %1085 = vmatpush.msra.mxu0 %v1084
  %v1086 = vand.u32 %v43, 4294901760
  %1087 = vmatpush.msra.mxu0 %v1086
  %v1088 = vand.u32 %v41, 4294901760
  %1089 = vmatpush.msra.mxu0 %v1088
  %v1090 = vand.u32 %v39, 4294901760
  %1091 = vmatpush.msra.mxu0 %v1090
  %v1092 = vand.u32 %v37, 4294901760
  %1093 = vmatpush.msra.mxu0 %v1092
  %v1094 = vand.u32 %v35, 4294901760
  %1095 = vmatpush.msra.mxu0 %v1094
  %v1096 = vand.u32 %v33, 4294901760
  %1097 = vmatpush.msra.mxu0 %v1096
  %v1098 = vand.u32 %v31, 4294901760
  %1099 = vmatpush.msra.mxu0 %v1098
  %v1100 = vand.u32 %v29, 4294901760
  %1101 = vmatpush.msra.mxu0 %v1100
  %v1102 = vand.u32 %v27, 4294901760
  %1103 = vmatpush.msra.mxu0 %v1102
  %v1104 = vand.u32 %v25, 4294901760
  %1105 = vmatpush.msra.mxu0 %v1104
  %v1106 = vand.u32 %v20, 4294901760
  %1107 = vmatmul.f32.gmra.mxu0 %v1106
  %v1108 = vpop.f32.mrf.mxu0
  %v1109 = vadd.f32 %v1072, %v1108
  %1110 = vdwg.mxu0
  %v1111 = vand.u32 %v87, 4294901760
  %1112 = vmatpush.msra.mxu0 %v1111
  %v1113 = vand.u32 %v85, 4294901760
  %1114 = vmatpush.msra.mxu0 %v1113
  %v1115 = vand.u32 %v83, 4294901760
  %1116 = vmatpush.msra.mxu0 %v1115
  %v1117 = vand.u32 %v81, 4294901760
  %1118 = vmatpush.msra.mxu0 %v1117
  %v1119 = vand.u32 %v79, 4294901760
  %1120 = vmatpush.msra.mxu0 %v1119
  %v1121 = vand.u32 %v77, 4294901760
  %1122 = vmatpush.msra.mxu0 %v1121
  %v1123 = vand.u32 %v75, 4294901760
  %1124 = vmatpush.msra.mxu0 %v1123
  %v1125 = vand.u32 %v73, 4294901760
  %1126 = vmatpush.msra.mxu0 %v1125
  %v1127 = vand.u32 %v71, 4294901760
  %1128 = vmatpush.msra.mxu0 %v1127
  %v1129 = vand.u32 %v69, 4294901760
  %1130 = vmatpush.msra.mxu0 %v1129
  %v1131 = vand.u32 %v67, 4294901760
  %1132 = vmatpush.msra.mxu0 %v1131
  %v1133 = vand.u32 %v65, 4294901760
  %1134 = vmatpush.msra.mxu0 %v1133
  %v1135 = vand.u32 %v63, 4294901760
  %1136 = vmatpush.msra.mxu0 %v1135
  %v1137 = vand.u32 %v61, 4294901760
  %1138 = vmatpush.msra.mxu0 %v1137
  %v1139 = vand.u32 %v59, 4294901760
  %1140 = vmatpush.msra.mxu0 %v1139
  %v1141 = vand.u32 %v57, 4294901760
  %1142 = vmatpush.msra.mxu0 %v1141
  %v1143 = vand.u32 %v21, 4294901760
  %v1144 = vsub.f32 %v21, %v1143
  %v1145 = vand.u32 %v1144, 4294901760
  %v1146 = vsub.f32 %v1144, %v1145
  %v1147 = vand.u32 %v1146, 4294901760
  %1148 = vmatmul.f32.gmra.mxu0 %v1147
  %v1149 = vpop.f32.mrf.mxu0
  %v1150 = vadd.f32 %v1109, %v1149
  %1151 = vdwg.mxu0
  %v1152 = vand.u32 %v87, 4294901760
  %v1153 = vsub.f32 %v87, %v1152
  %v1154 = vand.u32 %v1153, 4294901760
  %v1155 = vsub.f32 %v1153, %v1154
  %v1156 = vand.u32 %v1155, 4294901760
  %1157 = vmatpush.msra.mxu0 %v1156
  %v1158 = vand.u32 %v85, 4294901760
  %v1159 = vsub.f32 %v85, %v1158
  %v1160 = vand.u32 %v1159, 4294901760
  %v1161 = vsub.f32 %v1159, %v1160
  %v1162 = vand.u32 %v1161, 4294901760
  %1163 = vmatpush.msra.mxu0 %v1162
  %v1164 = vand.u32 %v83, 4294901760
  %v1165 = vsub.f32 %v83, %v1164
  %v1166 = vand.u32 %v1165, 4294901760
  %v1167 = vsub.f32 %v1165, %v1166
  %v1168 = vand.u32 %v1167, 4294901760
  %1169 = vmatpush.msra.mxu0 %v1168
  %v1170 = vand.u32 %v81, 4294901760
  %v1171 = vsub.f32 %v81, %v1170
  %v1172 = vand.u32 %v1171, 4294901760
  %v1173 = vsub.f32 %v1171, %v1172
  %v1174 = vand.u32 %v1173, 4294901760
  %1175 = vmatpush.msra.mxu0 %v1174
  %v1176 = vand.u32 %v79, 4294901760
  %v1177 = vsub.f32 %v79, %v1176
  %v1178 = vand.u32 %v1177, 4294901760
  %v1179 = vsub.f32 %v1177, %v1178
  %v1180 = vand.u32 %v1179, 4294901760
  %1181 = vmatpush.msra.mxu0 %v1180
  %v1182 = vand.u32 %v77, 4294901760
  %v1183 = vsub.f32 %v77, %v1182
  %v1184 = vand.u32 %v1183, 4294901760
  %v1185 = vsub.f32 %v1183, %v1184
  %v1186 = vand.u32 %v1185, 4294901760
  %1187 = vmatpush.msra.mxu0 %v1186
  %v1188 = vand.u32 %v75, 4294901760
  %v1189 = vsub.f32 %v75, %v1188
  %v1190 = vand.u32 %v1189, 4294901760
  %v1191 = vsub.f32 %v1189, %v1190
  %v1192 = vand.u32 %v1191, 4294901760
  %1193 = vmatpush.msra.mxu0 %v1192
  %v1194 = vand.u32 %v73, 4294901760
  %v1195 = vsub.f32 %v73, %v1194
  %v1196 = vand.u32 %v1195, 4294901760
  %v1197 = vsub.f32 %v1195, %v1196
  %v1198 = vand.u32 %v1197, 4294901760
  %1199 = vmatpush.msra.mxu0 %v1198
  %v1200 = vand.u32 %v71, 4294901760
  %v1201 = vsub.f32 %v71, %v1200
  %v1202 = vand.u32 %v1201, 4294901760
  %v1203 = vsub.f32 %v1201, %v1202
  %v1204 = vand.u32 %v1203, 4294901760
  %1205 = vmatpush.msra.mxu0 %v1204
  %v1206 = vand.u32 %v69, 4294901760
  %v1207 = vsub.f32 %v69, %v1206
  %v1208 = vand.u32 %v1207, 4294901760
  %v1209 = vsub.f32 %v1207, %v1208
  %v1210 = vand.u32 %v1209, 4294901760
  %1211 = vmatpush.msra.mxu0 %v1210
  %v1212 = vand.u32 %v67, 4294901760
  %v1213 = vsub.f32 %v67, %v1212
  %v1214 = vand.u32 %v1213, 4294901760
  %v1215 = vsub.f32 %v1213, %v1214
  %v1216 = vand.u32 %v1215, 4294901760
  %1217 = vmatpush.msra.mxu0 %v1216
  %v1218 = vand.u32 %v65, 4294901760
  %v1219 = vsub.f32 %v65, %v1218
  %v1220 = vand.u32 %v1219, 4294901760
  %v1221 = vsub.f32 %v1219, %v1220
  %v1222 = vand.u32 %v1221, 4294901760
  %1223 = vmatpush.msra.mxu0 %v1222
  %v1224 = vand.u32 %v63, 4294901760
  %v1225 = vsub.f32 %v63, %v1224
  %v1226 = vand.u32 %v1225, 4294901760
  %v1227 = vsub.f32 %v1225, %v1226
  %v1228 = vand.u32 %v1227, 4294901760
  %1229 = vmatpush.msra.mxu0 %v1228
  %v1230 = vand.u32 %v61, 4294901760
  %v1231 = vsub.f32 %v61, %v1230
  %v1232 = vand.u32 %v1231, 4294901760
  %v1233 = vsub.f32 %v1231, %v1232
  %v1234 = vand.u32 %v1233, 4294901760
  %1235 = vmatpush.msra.mxu0 %v1234
  %v1236 = vand.u32 %v59, 4294901760
  %v1237 = vsub.f32 %v59, %v1236
  %v1238 = vand.u32 %v1237, 4294901760
  %v1239 = vsub.f32 %v1237, %v1238
  %v1240 = vand.u32 %v1239, 4294901760
  %1241 = vmatpush.msra.mxu0 %v1240
  %v1242 = vand.u32 %v57, 4294901760
  %v1243 = vsub.f32 %v57, %v1242
  %v1244 = vand.u32 %v1243, 4294901760
  %v1245 = vsub.f32 %v1243, %v1244
  %v1246 = vand.u32 %v1245, 4294901760
  %1247 = vmatpush.msra.mxu0 %v1246
  %v1248 = vand.u32 %v21, 4294901760
  %1249 = vmatmul.f32.gmra.mxu0 %v1248
  %v1250 = vpop.f32.mrf.mxu0
  %v1251 = vadd.f32 %v1150, %v1250
  %1252 = vdwg.mxu0
  %v1253 = vand.u32 %v87, 4294901760
  %v1254 = vsub.f32 %v87, %v1253
  %1255 = vmatpush.msra.mxu0 %v1254
  %v1256 = vand.u32 %v85, 4294901760
  %v1257 = vsub.f32 %v85, %v1256
  %1258 = vmatpush.msra.mxu0 %v1257
  %v1259 = vand.u32 %v83, 4294901760
  %v1260 = vsub.f32 %v83, %v1259
  %1261 = vmatpush.msra.mxu0 %v1260
  %v1262 = vand.u32 %v81, 4294901760
  %v1263 = vsub.f32 %v81, %v1262
  %1264 = vmatpush.msra.mxu0 %v1263
  %v1265 = vand.u32 %v79, 4294901760
  %v1266 = vsub.f32 %v79, %v1265
  %1267 = vmatpush.msra.mxu0 %v1266
  %v1268 = vand.u32 %v77, 4294901760
  %v1269 = vsub.f32 %v77, %v1268
  %1270 = vmatpush.msra.mxu0 %v1269
  %v1271 = vand.u32 %v75, 4294901760
  %v1272 = vsub.f32 %v75, %v1271
  %1273 = vmatpush.msra.mxu0 %v1272
  %v1274 = vand.u32 %v73, 4294901760
  %v1275 = vsub.f32 %v73, %v1274
  %1276 = vmatpush.msra.mxu0 %v1275
  %v1277 = vand.u32 %v71, 4294901760
  %v1278 = vsub.f32 %v71, %v1277
  %1279 = vmatpush.msra.mxu0 %v1278
  %v1280 = vand.u32 %v69, 4294901760
  %v1281 = vsub.f32 %v69, %v1280
  %1282 = vmatpush.msra.mxu0 %v1281
  %v1283 = vand.u32 %v67, 4294901760
  %v1284 = vsub.f32 %v67, %v1283
  %1285 = vmatpush.msra.mxu0 %v1284
  %v1286 = vand.u32 %v65, 4294901760
  %v1287 = vsub.f32 %v65, %v1286
  %1288 = vmatpush.msra.mxu0 %v1287
  %v1289 = vand.u32 %v63, 4294901760
  %v1290 = vsub.f32 %v63, %v1289
  %1291 = vmatpush.msra.mxu0 %v1290
  %v1292 = vand.u32 %v61, 4294901760
  %v1293 = vsub.f32 %v61, %v1292
  %1294 = vmatpush.msra.mxu0 %v1293
  %v1295 = vand.u32 %v59, 4294901760
  %v1296 = vsub.f32 %v59, %v1295
  %1297 = vmatpush.msra.mxu0 %v1296
  %v1298 = vand.u32 %v57, 4294901760
  %v1299 = vsub.f32 %v57, %v1298
  %1300 = vmatpush.msra.mxu0 %v1299
  %v1301 = vand.u32 %v21, 4294901760
  %v1302 = vsub.f32 %v21, %v1301
  %1303 = vmatmul.f32.gmra.mxu0 %v1302
  %v1304 = vpop.f32.mrf.mxu0
  %v1305 = vadd.f32 %v1251, %v1304
  %1306 = vdwg.mxu0
  %v1307 = vand.u32 %v87, 4294901760
  %1308 = vmatpush.msra.mxu0 %v1307
  %v1309 = vand.u32 %v85, 4294901760
  %1310 = vmatpush.msra.mxu0 %v1309
  %v1311 = vand.u32 %v83, 4294901760
  %1312 = vmatpush.msra.mxu0 %v1311
  %v1313 = vand.u32 %v81, 4294901760
  %1314 = vmatpush.msra.mxu0 %v1313
  %v1315 = vand.u32 %v79, 4294901760
  %1316 = vmatpush.msra.mxu0 %v1315
  %v1317 = vand.u32 %v77, 4294901760
  %1318 = vmatpush.msra.mxu0 %v1317
  %v1319 = vand.u32 %v75, 4294901760
  %1320 = vmatpush.msra.mxu0 %v1319
  %v1321 = vand.u32 %v73, 4294901760
  %1322 = vmatpush.msra.mxu0 %v1321
  %v1323 = vand.u32 %v71, 4294901760
  %1324 = vmatpush.msra.mxu0 %v1323
  %v1325 = vand.u32 %v69, 4294901760
  %1326 = vmatpush.msra.mxu0 %v1325
  %v1327 = vand.u32 %v67, 4294901760
  %1328 = vmatpush.msra.mxu0 %v1327
  %v1329 = vand.u32 %v65, 4294901760
  %1330 = vmatpush.msra.mxu0 %v1329
  %v1331 = vand.u32 %v63, 4294901760
  %1332 = vmatpush.msra.mxu0 %v1331
  %v1333 = vand.u32 %v61, 4294901760
  %1334 = vmatpush.msra.mxu0 %v1333
  %v1335 = vand.u32 %v59, 4294901760
  %1336 = vmatpush.msra.mxu0 %v1335
  %v1337 = vand.u32 %v57, 4294901760
  %1338 = vmatpush.msra.mxu0 %v1337
  %v1339 = vand.u32 %v21, 4294901760
  %v1340 = vsub.f32 %v21, %v1339
  %v1341 = vand.u32 %v1340, 4294901760
  %1342 = vmatmul.f32.gmra.mxu0 %v1341
  %v1343 = vpop.f32.mrf.mxu0
  %v1344 = vadd.f32 %v1305, %v1343
  %1345 = vdwg.mxu0
  %v1346 = vand.u32 %v87, 4294901760
  %v1347 = vsub.f32 %v87, %v1346
  %v1348 = vand.u32 %v1347, 4294901760
  %1349 = vmatpush.msra.mxu0 %v1348
  %v1350 = vand.u32 %v85, 4294901760
  %v1351 = vsub.f32 %v85, %v1350
  %v1352 = vand.u32 %v1351, 4294901760
  %1353 = vmatpush.msra.mxu0 %v1352
  %v1354 = vand.u32 %v83, 4294901760
  %v1355 = vsub.f32 %v83, %v1354
  %v1356 = vand.u32 %v1355, 4294901760
  %1357 = vmatpush.msra.mxu0 %v1356
  %v1358 = vand.u32 %v81, 4294901760
  %v1359 = vsub.f32 %v81, %v1358
  %v1360 = vand.u32 %v1359, 4294901760
  %1361 = vmatpush.msra.mxu0 %v1360
  %v1362 = vand.u32 %v79, 4294901760
  %v1363 = vsub.f32 %v79, %v1362
  %v1364 = vand.u32 %v1363, 4294901760
  %1365 = vmatpush.msra.mxu0 %v1364
  %v1366 = vand.u32 %v77, 4294901760
  %v1367 = vsub.f32 %v77, %v1366
  %v1368 = vand.u32 %v1367, 4294901760
  %1369 = vmatpush.msra.mxu0 %v1368
  %v1370 = vand.u32 %v75, 4294901760
  %v1371 = vsub.f32 %v75, %v1370
  %v1372 = vand.u32 %v1371, 4294901760
  %1373 = vmatpush.msra.mxu0 %v1372
  %v1374 = vand.u32 %v73, 4294901760
  %v1375 = vsub.f32 %v73, %v1374
  %v1376 = vand.u32 %v1375, 4294901760
  %1377 = vmatpush.msra.mxu0 %v1376
  %v1378 = vand.u32 %v71, 4294901760
  %v1379 = vsub.f32 %v71, %v1378
  %v1380 = vand.u32 %v1379, 4294901760
  %1381 = vmatpush.msra.mxu0 %v1380
  %v1382 = vand.u32 %v69, 4294901760
  %v1383 = vsub.f32 %v69, %v1382
  %v1384 = vand.u32 %v1383, 4294901760
  %1385 = vmatpush.msra.mxu0 %v1384
  %v1386 = vand.u32 %v67, 4294901760
  %v1387 = vsub.f32 %v67, %v1386
  %v1388 = vand.u32 %v1387, 4294901760
  %1389 = vmatpush.msra.mxu0 %v1388
  %v1390 = vand.u32 %v65, 4294901760
  %v1391 = vsub.f32 %v65, %v1390
  %v1392 = vand.u32 %v1391, 4294901760
  %1393 = vmatpush.msra.mxu0 %v1392
  %v1394 = vand.u32 %v63, 4294901760
  %v1395 = vsub.f32 %v63, %v1394
  %v1396 = vand.u32 %v1395, 4294901760
  %1397 = vmatpush.msra.mxu0 %v1396
  %v1398 = vand.u32 %v61, 4294901760
  %v1399 = vsub.f32 %v61, %v1398
  %v1400 = vand.u32 %v1399, 4294901760
  %1401 = vmatpush.msra.mxu0 %v1400
  %v1402 = vand.u32 %v59, 4294901760
  %v1403 = vsub.f32 %v59, %v1402
  %v1404 = vand.u32 %v1403, 4294901760
  %1405 = vmatpush.msra.mxu0 %v1404
  %v1406 = vand.u32 %v57, 4294901760
  %v1407 = vsub.f32 %v57, %v1406
  %v1408 = vand.u32 %v1407, 4294901760
  %1409 = vmatpush.msra.mxu0 %v1408
  %v1410 = vand.u32 %v21, 4294901760
  %1411 = vmatmul.f32.gmra.mxu0 %v1410
  %v1412 = vpop.f32.mrf.mxu0
  %v1413 = vadd.f32 %v1344, %v1412
  %1414 = vdwg.mxu0
  %v1415 = vand.u32 %v87, 4294901760
  %1416 = vmatpush.msra.mxu0 %v1415
  %v1417 = vand.u32 %v85, 4294901760
  %1418 = vmatpush.msra.mxu0 %v1417
  %v1419 = vand.u32 %v83, 4294901760
  %1420 = vmatpush.msra.mxu0 %v1419
  %v1421 = vand.u32 %v81, 4294901760
  %1422 = vmatpush.msra.mxu0 %v1421
  %v1423 = vand.u32 %v79, 4294901760
  %1424 = vmatpush.msra.mxu0 %v1423
  %v1425 = vand.u32 %v77, 4294901760
  %1426 = vmatpush.msra.mxu0 %v1425
  %v1427 = vand.u32 %v75, 4294901760
  %1428 = vmatpush.msra.mxu0 %v1427
  %v1429 = vand.u32 %v73, 4294901760
  %1430 = vmatpush.msra.mxu0 %v1429
  %v1431 = vand.u32 %v71, 4294901760
  %1432 = vmatpush.msra.mxu0 %v1431
  %v1433 = vand.u32 %v69, 4294901760
  %1434 = vmatpush.msra.mxu0 %v1433
  %v1435 = vand.u32 %v67, 4294901760
  %1436 = vmatpush.msra.mxu0 %v1435
  %v1437 = vand.u32 %v65, 4294901760
  %1438 = vmatpush.msra.mxu0 %v1437
  %v1439 = vand.u32 %v63, 4294901760
  %1440 = vmatpush.msra.mxu0 %v1439
  %v1441 = vand.u32 %v61, 4294901760
  %1442 = vmatpush.msra.mxu0 %v1441
  %v1443 = vand.u32 %v59, 4294901760
  %1444 = vmatpush.msra.mxu0 %v1443
  %v1445 = vand.u32 %v57, 4294901760
  %1446 = vmatpush.msra.mxu0 %v1445
  %v1447 = vand.u32 %v21, 4294901760
  %1448 = vmatmul.f32.gmra.mxu0 %v1447
  %v1449 = vpop.f32.mrf.mxu0
  %v1450 = vadd.f32 %v1413, %v1449
  %1451 = vdwg.mxu0
  %v1452 = vadd.f32 %v22, %v768
  %v1453 = vadd.f32 %v23, %v1450
  %1454 = vst [vmem:[%s3] sm:$0xff] %v1452
  %1455 = vst [vmem:[%s3 + $0x8] sm:$0xff] %v1453
  // Predicated region
  $region18: #{_lambda_.1} parent=0 // pred_check
    %p1456 = pneg %p14
  $region19: #{_lambda_.1} parent=0 // pred_check_branch
    %1458 = sbr.rel (%p1456) target = $region21
  $region20: #{_lambda_.1} parent=0 // pred_region
    %v1459 = vld [vmem:[%s3] sm:$0xff]
    %v1460 = vld [vmem:[%s3 + $0x8] sm:$0xff]
    %v1461 = vld [vmem:[%s2] sm:$0x3]
    %v1463 = vperm.slane %v1461, 0
    %v1464 = vperm.slane %v1461, 1
    %v1467 = vadd.f32 %v1459, %v1463
    %v1468 = vadd.f32 %v1460, %v1464
    %v1469 = vmax.f32 %v1467, 0.0
    %v1470 = vmax.f32 %v1468, 0.0
    %1471 = vst [vmem:[%s3] sm:$0xff] %v1469
    %1472 = vst [vmem:[%s3 + $0x8] sm:$0xff] %v1470
  $region21: #{_lambda_.1} parent=0 // pred_fallthru
    _
  // Predicated region
  $region22: #{_lambda_.1} parent=0 // pred_check
    _
  $region23: #{_lambda_.1} parent=0 // pred_check_branch
    %1474 = sbr.rel (0) target = $region25
  $region24: #{_lambda_.1} parent=0 // pred_region
    _
  $region25: #{_lambda_.1} parent=0 // pred_fallthru
    _
  // Predicated region
  $region26: #{_lambda_.1} parent=0 // pred_check
    _
  $region27: #{_lambda_.1} parent=0 // pred_check_branch
    %1476 = sbr.rel (0) target = $region29
  $region28: #{_lambda_.1} parent=0 // pred_region
    _
  $region29: #{_lambda_.1} parent=0 // pred_fallthru
    _

</llo_original>
